<compile_context>
chip_gen: v5e
topology: v5e:2x2
jax: 0.10.0
libtpu: 0.0.40
codegen_flags: <defaults>
</compile_context>

<pallas_src>
import math
from functools import partial

import jax
import jax.numpy as jnp
from jax.experimental import pallas as pl
from jax.experimental.pallas import tpu as pltpu

_BF16 = jnp.bfloat16
_F32 = jnp.float32
_VMEM_LIMIT = 64 * 1024 * 1024


def _row_tile(m):
    for t in (512, 256, 128):
        if m % t == 0:
            return t
    return m


# --------------------------- linear:  x @ W + b -----------------------------

def _linear_kernel(x_ref, w_ref, b_ref, o_ref):
    acc = jnp.dot(x_ref[...], w_ref[...], preferred_element_type=_F32)
    o_ref[...] = (acc + b_ref[...]).astype(o_ref.dtype)


def _linear(x2d, w, b, out_dtype):
    """x2d: (M, Din) bf16; w: (Din, Dout) bf16 (already transposed/scaled); b: (1, Dout) f32."""
    M, Din = x2d.shape
    Dout = w.shape[1]
    tm = _row_tile(M)
    return pl.pallas_call(
        _linear_kernel,
        out_shape=jax.ShapeDtypeStruct((M, Dout), out_dtype),
        grid_spec=pltpu.PrefetchScalarGridSpec(
            num_scalar_prefetch=0,
            grid=(M // tm,),
            in_specs=[
                pl.BlockSpec((tm, Din), lambda i: (i, 0)),
                pl.BlockSpec((Din, Dout), lambda i: (0, 0)),
                pl.BlockSpec((1, Dout), lambda i: (0, 0)),
            ],
            out_specs=pl.BlockSpec((tm, Dout), lambda i: (i, 0)),
        ),
        compiler_params=pltpu.CompilerParams(
            dimension_semantics=("parallel",),
            vmem_limit_bytes=_VMEM_LIMIT),
    )(x2d, w, b)


# ------------------------- flash attention (per head) -----------------------

def _flash_kernel(q_ref, k_ref, v_ref, mask_ref, o_ref, m_sc, l_sc, acc_sc):
    ki = pl.program_id(2)

    @pl.when(ki == 0)
    def _init():
        m_sc[...] = jnp.full_like(m_sc, -jnp.inf)
        l_sc[...] = jnp.zeros_like(l_sc)
        acc_sc[...] = jnp.zeros_like(acc_sc)

    q = q_ref[0]                                   # (H, tq, dh) bf16, scale pre-folded
    k = k_ref[0]                                   # (H, tk, dh) bf16
    v = v_ref[0]                                   # (H, tk, dh) bf16

    # Batched-over-heads QK^T logits, f32 accumulation.
    logits = jnp.einsum("hqe,hke->hqk", q, k, preferred_element_type=_F32)
    # Additive mask (1 = masked).  bf16 stream is exact for 0/1 masks.
    neg_mask = mask_ref[0, 0].astype(_F32) * (-1e9)          # (tq, tk), once per step
    logits = logits + neg_mask[None]

    # Online (flash) softmax update; statistics stay in f32.
    m_prev = m_sc[...]
    m_new = jnp.maximum(m_prev, jnp.max(logits, axis=-1, keepdims=True))
    alpha = jnp.exp(m_prev - m_new)
    p = jnp.exp(logits - m_new)                               # (H, tq, tk) f32
    l_sc[...] = alpha * l_sc[...] + jnp.sum(p, axis=-1, keepdims=True)
    acc_sc[...] = alpha * acc_sc[...] + jnp.einsum(
        "hqk,hke->hqe", p.astype(_BF16), v, preferred_element_type=_F32)
    m_sc[...] = m_new

    @pl.when(ki == pl.num_programs(2) - 1)
    def _finalize():
        ctx = acc_sc[...] * pl.reciprocal(l_sc[...], approx=True)   # (H, tq, dh) f32
        o_ref[0] = ctx.astype(o_ref.dtype)


def _flash_attention(qh, kh, vh, mask, *, block_q=None, block_k=None):
    """qh: (B,H,Sq,dh) bf16; kh/vh: (B,H,Sk,dh) bf16; mask: (B,1,Sq,Sk) bf16."""
    B, H, Sq, dh = qh.shape
    Sk = kh.shape[2]

    if block_q is None:
        block_q = 128 if Sq % 128 == 0 else Sq
    if block_k is None:
        # 256-wide kv tiles fill the 2x256 MXU on v6e/v7x and halve grid steps.
        block_k = 256 if Sk % 256 == 0 else (128 if Sk % 128 == 0 else Sk)
    assert Sq % block_q == 0 and Sk % block_k == 0
    nq, nk = Sq // block_q, Sk // block_k

    q_spec = pl.BlockSpec((1, H, block_q, dh), lambda b, qi, ki: (b, 0, qi, 0))
    kv_spec = pl.BlockSpec((1, H, block_k, dh), lambda b, qi, ki: (b, 0, ki, 0))
    mask_spec = pl.BlockSpec((1, 1, block_q, block_k),
                             lambda b, qi, ki: (b, 0, qi, ki))
    out_spec = pl.BlockSpec((1, H, block_q, dh), lambda b, qi, ki: (b, 0, qi, 0))

    return pl.pallas_call(
        _flash_kernel,
        out_shape=jax.ShapeDtypeStruct((B, H, Sq, dh), _BF16),
        grid_spec=pltpu.PrefetchScalarGridSpec(
            num_scalar_prefetch=0,
            grid=(B, nq, nk),
            in_specs=[q_spec, kv_spec, kv_spec, mask_spec],
            out_specs=out_spec,
            scratch_shapes=[
                pltpu.VMEM((H, block_q, 1), _F32),    # running max m
                pltpu.VMEM((H, block_q, 1), _F32),    # running denom l
                pltpu.VMEM((H, block_q, dh), _F32),   # context accumulator
            ]),
        compiler_params=pltpu.CompilerParams(
            dimension_semantics=("parallel", "parallel", "arbitrary"),
            vmem_limit_bytes=_VMEM_LIMIT),
    )(qh, kh, vh, mask)


# ------------------------------ full module ---------------------------------

def prepare_params(params, num_heads):
    """One-time host-side weight re-layout (PyTorch (out,in) -> (in,out) bf16),
    folding 1/sqrt(depth) into Wq/bq."""
    D = params["Wq"].shape[0]
    depth = D // num_heads
    scale = 1.0 / math.sqrt(depth)
    return {
        "wq": (params["Wq"].astype(_F32).T * scale).astype(_BF16),
        "bq": (params["bq"].astype(_F32) * scale).reshape(1, D),
        "wk": params["Wk"].astype(_F32).T.astype(_BF16),
        "bk": params["bk"].astype(_F32).reshape(1, D),
        "wv": params["Wv"].astype(_F32).T.astype(_BF16),
        "bv": params["bv"].astype(_F32).reshape(1, D),
        "wo": params["Wo"].astype(_F32).T.astype(_BF16),
        "bo": params["bo"].astype(_F32).reshape(1, D),
    }


def multi_head_attention(v, k, q, mask, prepared, *, num_heads,
                         block_q=None, block_k=None):
    """Forward pass matching the PyTorch MultiHeadAttention module.

    mask: (B, 1, Sq, Sk) with 1 = masked (applied as logits += mask * -1e9),
    or None for unmasked attention.
    """
    B, Sq, D = q.shape
    Sk = k.shape[1]
    assert D % num_heads == 0
    depth = D // num_heads

    if mask is None:
        mask = jnp.zeros((B, 1, Sq, Sk), _F32)
    mask = mask.astype(_BF16)   # exact for 0/1 masks

    # ---- Q/K/V projections: one lane-dense GEMM each, computed once. ----
    qp = _linear(q.astype(_BF16).reshape(B * Sq, D), prepared["wq"], prepared["bq"], _BF16)
    kp = _linear(k.astype(_BF16).reshape(B * Sk, D), prepared["wk"], prepared["bk"], _BF16)
    vp = _linear(v.astype(_BF16).reshape(B * Sk, D), prepared["wv"], prepared["bv"], _BF16)

    def split_heads(x2d, S):
        return x2d.reshape(B, S, num_heads, depth).transpose(0, 2, 1, 3)

    qh, kh, vh = split_heads(qp, Sq), split_heads(kp, Sk), split_heads(vp, Sk)

    # ---- Flash attention (all heads per grid step, online softmax). ----
    ctx = _flash_attention(qh, kh, vh, mask, block_q=block_q, block_k=block_k)

    # ---- Merge heads + output projection (single full-K GEMM). ----
    ctx2d = ctx.transpose(0, 2, 1, 3).reshape(B * Sq, D)
    out = _linear(ctx2d, prepared["wo"], prepared["bo"], _F32)
    return out.reshape(B, Sq, D)


# ------------------------------ reference -----------------------------------

def _reference(v, k, q, mask, params, *, num_heads):
    """Pure-JAX f32 reference mirroring the PyTorch forward exactly."""
    B, S, D = q.shape
    depth = D // num_heads

    def lin(x, W, b):
        return x @ W.T + b

    qp = lin(q, params["Wq"], params["bq"])
    kp = lin(k, params["Wk"], params["bk"])
    vp = lin(v, params["Wv"], params["bv"])

    def split(x):
        return x.reshape(B, S, num_heads, depth).transpose(0, 2, 1, 3)

    qh, kh, vh = split(qp), split(kp), split(vp)
    logits = jnp.einsum("bhqd,bhkd->bhqk", qh, kh) / math.sqrt(depth)
    if mask is not None:
        logits = logits + mask * (-1e9)
    attn = jax.nn.softmax(logits, axis=-1)
    out = jnp.einsum("bhqk,bhkd->bhqd", attn, vh)
    out = out.transpose(0, 2, 1, 3).reshape(B, S, D)
    return lin(out, params["Wo"], params["bo"])


if __name__ == "__main__":
    B, S, D, H = 2, 8, 32, 4

    key = jax.random.PRNGKey(0)
    keys = jax.random.split(key, 12)

    # Deterministic "Linear" params (PyTorch layout: W is (out, in)).
    bound = 1.0 / math.sqrt(D)
    params = {
        "Wq": jax.random.uniform(keys[0], (D, D), jnp.float32, -bound, bound),
        "bq": jax.random.uniform(keys[1], (D,), jnp.float32, -bound, bound),
        "Wk": jax.random.uniform(keys[2], (D, D), jnp.float32, -bound, bound),
        "bk": jax.random.uniform(keys[3], (D,), jnp.float32, -bound, bound),
        "Wv": jax.random.uniform(keys[4], (D, D), jnp.float32, -bound, bound),
        "bv": jax.random.uniform(keys[5], (D,), jnp.float32, -bound, bound),
        "Wo": jax.random.uniform(keys[6], (D, D), jnp.float32, -bound, bound),
        "bo": jax.random.uniform(keys[7], (D,), jnp.float32, -bound, bound),
    }

    q = jax.random.normal(keys[8], (B, S, D), jnp.float32)
    k = jax.random.normal(keys[9], (B, S, D), jnp.float32)
    v = jax.random.normal(keys[10], (B, S, D), jnp.float32)
    # Causal-style additive mask (1 = masked), broadcast over heads.
    mask = (1.0 - jnp.tril(jnp.ones((S, S), jnp.float32)))[None, None].repeat(B, axis=0)

    prepared = prepare_params(params, H)
    fwd = jax.jit(partial(multi_head_attention, num_heads=H))

    out = fwd(v, k, q, mask, prepared)
    jax.block_until_ready(out)

    ref = _reference(v, k, q, mask, params, num_heads=H)
    assert out.shape == (B, S, D)
    # bf16 MXU operands with f32 accumulation -> relaxed (but bug-detecting) tolerance.
    assert jnp.allclose(out, ref, atol=5e-2, rtol=5e-2), (
        "mismatch vs reference, max abs err = "
        f"{float(jnp.max(jnp.abs(out - ref)))}")

    print("KERNEL_OK")
</pallas_src>

<mosaic_0001>
module attributes {stable_mosaic.version = 11 : i64} {
  func.func @_linear_kernel(%arg0: i32, %arg1: memref<16x32xbf16, #tpu.memory_space<vmem>>, %arg2: memref<32x32xbf16, #tpu.memory_space<vmem>>, %arg3: memref<1x32xf32, #tpu.memory_space<vmem>>, %arg4: memref<16x32xbf16, #tpu.memory_space<vmem>>) attributes {dimension_semantics = [#tpu.dimension_semantics<parallel>], iteration_bounds = array<i64: 1>, scalar_prefetch = 0 : i64, scratch_operands = 0 : i64, tpu.core_type = #tpu.core_type<tc>, window_params = [{transform_indices = @transform_0, window_bounds = array<i64: 16, 32>}, {pipeline_mode = #tpu.pipeline_mode<synchronous>, transform_indices = @transform_1, window_bounds = array<i64: 32, 32>}, {pipeline_mode = #tpu.pipeline_mode<synchronous>, transform_indices = @transform_2, window_bounds = array<i64: 1, 32>}, {transform_indices = @transform_3, window_bounds = array<i64: 16, 32>}]} {
    %c0 = arith.constant 0 : index
    %c0_0 = arith.constant 0 : index
    %0 = vector.load %arg1[%c0, %c0_0] : memref<16x32xbf16, #tpu.memory_space<vmem>>, vector<16x32xbf16>
    %c0_1 = arith.constant 0 : index
    %c0_2 = arith.constant 0 : index
    %1 = vector.load %arg2[%c0_1, %c0_2] : memref<32x32xbf16, #tpu.memory_space<vmem>>, vector<32x32xbf16>
    %cst = arith.constant dense<0.000000e+00> : vector<16x32xf32>
    %2 = tpu.matmul %0, %1, %cst {dimension_numbers = #tpu.dot_dimension_numbers<[1], [0], [0], [1], [0, 0, 1, 1], [], []>} : vector<16x32xbf16>, vector<32x32xbf16>, vector<16x32xf32> -> vector<16x32xf32>
    %c0_3 = arith.constant 0 : index
    %c0_4 = arith.constant 0 : index
    %3 = vector.load %arg3[%c0_3, %c0_4] : memref<1x32xf32, #tpu.memory_space<vmem>>, vector<1x32xf32>
    %4 = vector.broadcast %3 : vector<1x32xf32> to vector<16x32xf32>
    %5 = arith.addf %2, %4 : vector<16x32xf32>
    %6 = arith.truncf %5 : vector<16x32xf32> to vector<16x32xbf16>
    %c0_5 = arith.constant 0 : index
    %c0_6 = arith.constant 0 : index
    %7 = vector.load %arg4[%c0_5, %c0_6] : memref<16x32xbf16, #tpu.memory_space<vmem>>, vector<16x32xbf16>
    tpu.vector_store %arg4[%c0_5, %c0_6], %6 {strides = array<i32>} : memref<16x32xbf16, #tpu.memory_space<vmem>>, vector<16x32xbf16>,
    return
  }
  func.func @transform_0(%arg0: i32) -> (i32, i32) {
    %c0_i32 = arith.constant 0 : i32
    %c0_i32_0 = arith.constant 0 : i32
    return %arg0, %c0_i32 : i32, i32
  }
  func.func @transform_1(%arg0: i32) -> (i32, i32) {
    %c0_i32 = arith.constant 0 : i32
    %c0_i32_0 = arith.constant 0 : i32
    %c0_i32_1 = arith.constant 0 : i32
    return %c0_i32, %c0_i32_0 : i32, i32
  }
  func.func @transform_2(%arg0: i32) -> (i32, i32) {
    %c0_i32 = arith.constant 0 : i32
    %c0_i32_0 = arith.constant 0 : i32
    %c0_i32_1 = arith.constant 0 : i32
    return %c0_i32, %c0_i32_0 : i32, i32
  }
  func.func @transform_3(%arg0: i32) -> (i32, i32) {
    %c0_i32 = arith.constant 0 : i32
    %c0_i32_0 = arith.constant 0 : i32
    return %arg0, %c0_i32 : i32, i32
  }
}

module attributes {stable_mosaic.version = 11 : i64} {
  func.func @_linear_kernel(%arg0: i32, %arg1: memref<16x32xbf16, #tpu.memory_space<vmem>>, %arg2: memref<32x32xbf16, #tpu.memory_space<vmem>>, %arg3: memref<1x32xf32, #tpu.memory_space<vmem>>, %arg4: memref<16x32xbf16, #tpu.memory_space<vmem>>) attributes {dimension_semantics = [#tpu.dimension_semantics<parallel>], iteration_bounds = array<i64: 1>, scalar_prefetch = 0 : i64, scratch_operands = 0 : i64, tpu.core_type = #tpu.core_type<tc>, window_params = [{transform_indices = @transform_0, window_bounds = array<i64: 16, 32>}, {pipeline_mode = #tpu.pipeline_mode<synchronous>, transform_indices = @transform_1, window_bounds = array<i64: 32, 32>}, {pipeline_mode = #tpu.pipeline_mode<synchronous>, transform_indices = @transform_2, window_bounds = array<i64: 1, 32>}, {transform_indices = @transform_3, window_bounds = array<i64: 16, 32>}]} {
    %c0 = arith.constant 0 : index
    %c0_0 = arith.constant 0 : index
    %0 = vector.load %arg1[%c0, %c0_0] : memref<16x32xbf16, #tpu.memory_space<vmem>>, vector<16x32xbf16>
    %c0_1 = arith.constant 0 : index
    %c0_2 = arith.constant 0 : index
    %1 = vector.load %arg2[%c0_1, %c0_2] : memref<32x32xbf16, #tpu.memory_space<vmem>>, vector<32x32xbf16>
    %cst = arith.constant dense<0.000000e+00> : vector<16x32xf32>
    %2 = tpu.matmul %0, %1, %cst {dimension_numbers = #tpu.dot_dimension_numbers<[1], [0], [0], [1], [0, 0, 1, 1], [], []>} : vector<16x32xbf16>, vector<32x32xbf16>, vector<16x32xf32> -> vector<16x32xf32>
    %c0_3 = arith.constant 0 : index
    %c0_4 = arith.constant 0 : index
    %3 = vector.load %arg3[%c0_3, %c0_4] : memref<1x32xf32, #tpu.memory_space<vmem>>, vector<1x32xf32>
    %4 = vector.broadcast %3 : vector<1x32xf32> to vector<16x32xf32>
    %5 = arith.addf %2, %4 : vector<16x32xf32>
    %6 = arith.truncf %5 : vector<16x32xf32> to vector<16x32xbf16>
    %c0_5 = arith.constant 0 : index
    %c0_6 = arith.constant 0 : index
    %7 = vector.load %arg4[%c0_5, %c0_6] : memref<16x32xbf16, #tpu.memory_space<vmem>>, vector<16x32xbf16>
    tpu.vector_store %arg4[%c0_5, %c0_6], %6 {strides = array<i32>} : memref<16x32xbf16, #tpu.memory_space<vmem>>, vector<16x32xbf16>,
    return
  }
  func.func @transform_0(%arg0: i32) -> (i32, i32) {
    %c0_i32 = arith.constant 0 : i32
    %c0_i32_0 = arith.constant 0 : i32
    return %arg0, %c0_i32 : i32, i32
  }
  func.func @transform_1(%arg0: i32) -> (i32, i32) {
    %c0_i32 = arith.constant 0 : i32
    %c0_i32_0 = arith.constant 0 : i32
    %c0_i32_1 = arith.constant 0 : i32
    return %c0_i32, %c0_i32_0 : i32, i32
  }
  func.func @transform_2(%arg0: i32) -> (i32, i32) {
    %c0_i32 = arith.constant 0 : i32
    %c0_i32_0 = arith.constant 0 : i32
    %c0_i32_1 = arith.constant 0 : i32
    return %c0_i32, %c0_i32_0 : i32, i32
  }
  func.func @transform_3(%arg0: i32) -> (i32, i32) {
    %c0_i32 = arith.constant 0 : i32
    %c0_i32_0 = arith.constant 0 : i32
    return %arg0, %c0_i32 : i32, i32
  }
}

module attributes {stable_mosaic.version = 11 : i64} {
  func.func @_linear_kernel(%arg0: i32, %arg1: memref<16x32xbf16, #tpu.memory_space<vmem>>, %arg2: memref<32x32xbf16, #tpu.memory_space<vmem>>, %arg3: memref<1x32xf32, #tpu.memory_space<vmem>>, %arg4: memref<16x32xbf16, #tpu.memory_space<vmem>>) attributes {dimension_semantics = [#tpu.dimension_semantics<parallel>], iteration_bounds = array<i64: 1>, scalar_prefetch = 0 : i64, scratch_operands = 0 : i64, tpu.core_type = #tpu.core_type<tc>, window_params = [{transform_indices = @transform_0, window_bounds = array<i64: 16, 32>}, {pipeline_mode = #tpu.pipeline_mode<synchronous>, transform_indices = @transform_1, window_bounds = array<i64: 32, 32>}, {pipeline_mode = #tpu.pipeline_mode<synchronous>, transform_indices = @transform_2, window_bounds = array<i64: 1, 32>}, {transform_indices = @transform_3, window_bounds = array<i64: 16, 32>}]} {
    %c0 = arith.constant 0 : index
    %c0_0 = arith.constant 0 : index
    %0 = vector.load %arg1[%c0, %c0_0] : memref<16x32xbf16, #tpu.memory_space<vmem>>, vector<16x32xbf16>
    %c0_1 = arith.constant 0 : index
    %c0_2 = arith.constant 0 : index
    %1 = vector.load %arg2[%c0_1, %c0_2] : memref<32x32xbf16, #tpu.memory_space<vmem>>, vector<32x32xbf16>
    %cst = arith.constant dense<0.000000e+00> : vector<16x32xf32>
    %2 = tpu.matmul %0, %1, %cst {dimension_numbers = #tpu.dot_dimension_numbers<[1], [0], [0], [1], [0, 0, 1, 1], [], []>} : vector<16x32xbf16>, vector<32x32xbf16>, vector<16x32xf32> -> vector<16x32xf32>
    %c0_3 = arith.constant 0 : index
    %c0_4 = arith.constant 0 : index
    %3 = vector.load %arg3[%c0_3, %c0_4] : memref<1x32xf32, #tpu.memory_space<vmem>>, vector<1x32xf32>
    %4 = vector.broadcast %3 : vector<1x32xf32> to vector<16x32xf32>
    %5 = arith.addf %2, %4 : vector<16x32xf32>
    %6 = arith.truncf %5 : vector<16x32xf32> to vector<16x32xbf16>
    %c0_5 = arith.constant 0 : index
    %c0_6 = arith.constant 0 : index
    %7 = vector.load %arg4[%c0_5, %c0_6] : memref<16x32xbf16, #tpu.memory_space<vmem>>, vector<16x32xbf16>
    tpu.vector_store %arg4[%c0_5, %c0_6], %6 {strides = array<i32>} : memref<16x32xbf16, #tpu.memory_space<vmem>>, vector<16x32xbf16>,
    return
  }
  func.func @transform_0(%arg0: i32) -> (i32, i32) {
    %c0_i32 = arith.constant 0 : i32
    %c0_i32_0 = arith.constant 0 : i32
    return %arg0, %c0_i32 : i32, i32
  }
  func.func @transform_1(%arg0: i32) -> (i32, i32) {
    %c0_i32 = arith.constant 0 : i32
    %c0_i32_0 = arith.constant 0 : i32
    %c0_i32_1 = arith.constant 0 : i32
    return %c0_i32, %c0_i32_0 : i32, i32
  }
  func.func @transform_2(%arg0: i32) -> (i32, i32) {
    %c0_i32 = arith.constant 0 : i32
    %c0_i32_0 = arith.constant 0 : i32
    %c0_i32_1 = arith.constant 0 : i32
    return %c0_i32, %c0_i32_0 : i32, i32
  }
  func.func @transform_3(%arg0: i32) -> (i32, i32) {
    %c0_i32 = arith.constant 0 : i32
    %c0_i32_0 = arith.constant 0 : i32
    return %arg0, %c0_i32 : i32, i32
  }
}

module attributes {stable_mosaic.version = 11 : i64} {
  func.func @_flash_kernel(%arg0: i32, %arg1: i32, %arg2: i32, %arg3: memref<1x4x8x8xbf16, #tpu.memory_space<vmem>>, %arg4: memref<1x4x8x8xbf16, #tpu.memory_space<vmem>>, %arg5: memref<1x4x8x8xbf16, #tpu.memory_space<vmem>>, %arg6: memref<1x1x8x8xbf16, #tpu.memory_space<vmem>>, %arg7: memref<1x4x8x8xbf16, #tpu.memory_space<vmem>>, %arg8: memref<4x8x1xf32, #tpu.memory_space<vmem>>, %arg9: memref<4x8x1xf32, #tpu.memory_space<vmem>>, %arg10: memref<4x8x8xf32, #tpu.memory_space<vmem>>) attributes {dimension_semantics = [#tpu.dimension_semantics<parallel>, #tpu.dimension_semantics<parallel>, #tpu.dimension_semantics<arbitrary>], iteration_bounds = array<i64: 2, 1, 1>, scalar_prefetch = 0 : i64, scratch_operands = 3 : i64, tpu.core_type = #tpu.core_type<tc>, window_params = [{transform_indices = @transform_0, window_bounds = array<i64: 1, 4, 8, 8>}, {transform_indices = @transform_1, window_bounds = array<i64: 1, 4, 8, 8>}, {transform_indices = @transform_2, window_bounds = array<i64: 1, 4, 8, 8>}, {transform_indices = @transform_3, window_bounds = array<i64: 1, 1, 8, 8>}, {transform_indices = @transform_4, window_bounds = array<i64: 1, 4, 8, 8>}]} {
    %c0_i32 = arith.constant 0 : i32
    %0 = arith.cmpi eq, %arg2, %c0_i32 : i32
    %1 = arith.extui %0 : i1 to i32
    %c0_i32_0 = arith.constant 0 : i32
    %2 = arith.cmpi ne, %1, %c0_i32_0 : i32
    scf.if %2 {
      %cst_40 = arith.constant 0xFF800000 : f32
      %44 = vector.broadcast %cst_40 : f32 to vector<4x8x1xf32>
      %c0_41 = arith.constant 0 : index
      %c0_42 = arith.constant 0 : index
      %c0_43 = arith.constant 0 : index
      %45 = vector.load %arg8[%c0_41, %c0_42, %c0_43] : memref<4x8x1xf32, #tpu.memory_space<vmem>>, vector<4x8x1xf32>
      tpu.vector_store %arg8[%c0_41, %c0_42, %c0_43], %44 {strides = array<i32>} : memref<4x8x1xf32, #tpu.memory_space<vmem>>, vector<4x8x1xf32>,
      %cst_44 = arith.constant 0.000000e+00 : f32
      %46 = vector.broadcast %cst_44 : f32 to vector<4x8x1xf32>
      %c0_45 = arith.constant 0 : index
      %c0_46 = arith.constant 0 : index
      %c0_47 = arith.constant 0 : index
      %47 = vector.load %arg9[%c0_45, %c0_46, %c0_47] : memref<4x8x1xf32, #tpu.memory_space<vmem>>, vector<4x8x1xf32>
      tpu.vector_store %arg9[%c0_45, %c0_46, %c0_47], %46 {strides = array<i32>} : memref<4x8x1xf32, #tpu.memory_space<vmem>>, vector<4x8x1xf32>,
      %cst_48 = arith.constant 0.000000e+00 : f32
      %48 = vector.broadcast %cst_48 : f32 to vector<4x8x8xf32>
      %c0_49 = arith.constant 0 : index
      %c0_50 = arith.constant 0 : index
      %c0_51 = arith.constant 0 : index
      %49 = vector.load %arg10[%c0_49, %c0_50, %c0_51] : memref<4x8x8xf32, #tpu.memory_space<vmem>>, vector<4x8x8xf32>
      tpu.vector_store %arg10[%c0_49, %c0_50, %c0_51], %48 {strides = array<i32>} : memref<4x8x8xf32, #tpu.memory_space<vmem>>, vector<4x8x8xf32>,
    } else {
    }
    %c0 = arith.constant 0 : index
    %c0_1 = arith.constant 0 : index
    %c0_2 = arith.constant 0 : index
    %c0_3 = arith.constant 0 : index
    %3 = vector.load %arg3[%c0, %c0_1, %c0_2, %c0_3] : memref<1x4x8x8xbf16, #tpu.memory_space<vmem>>, vector<1x4x8x8xbf16>
    %4 = vector.shape_cast %3 : vector<1x4x8x8xbf16> to vector<4x8x8xbf16>
    %c0_4 = arith.constant 0 : index
    %c0_5 = arith.constant 0 : index
    %c0_6 = arith.constant 0 : index
    %c0_7 = arith.constant 0 : index
    %5 = vector.load %arg4[%c0_4, %c0_5, %c0_6, %c0_7] : memref<1x4x8x8xbf16, #tpu.memory_space<vmem>>, vector<1x4x8x8xbf16>
    %6 = vector.shape_cast %5 : vector<1x4x8x8xbf16> to vector<4x8x8xbf16>
    %c0_8 = arith.constant 0 : index
    %c0_9 = arith.constant 0 : index
    %c0_10 = arith.constant 0 : index
    %c0_11 = arith.constant 0 : index
    %7 = vector.load %arg5[%c0_8, %c0_9, %c0_10, %c0_11] : memref<1x4x8x8xbf16, #tpu.memory_space<vmem>>, vector<1x4x8x8xbf16>
    %8 = vector.shape_cast %7 : vector<1x4x8x8xbf16> to vector<4x8x8xbf16>
    "tpu.trace_start"() <{level = 10 : i32, message = "hqe,hke->hqk"}> : () -> ()
    %cst = arith.constant dense<0.000000e+00> : vector<4x8x8xf32>
    %9 = tpu.matmul %4, %6, %cst {dimension_numbers = #tpu.dot_dimension_numbers<[2], [2], [1], [1], [0, 0, 0, 1, 1, 1], [0], [0]>} : vector<4x8x8xbf16>, vector<4x8x8xbf16>, vector<4x8x8xf32> -> vector<4x8x8xf32>
    "tpu.trace_stop"() : () -> ()
    %c0_12 = arith.constant 0 : index
    %c0_13 = arith.constant 0 : index
    %c0_14 = arith.constant 0 : index
    %c0_15 = arith.constant 0 : index
    %10 = vector.load %arg6[%c0_12, %c0_13, %c0_14, %c0_15] : memref<1x1x8x8xbf16, #tpu.memory_space<vmem>>, vector<1x1x8x8xbf16>
    %11 = vector.shape_cast %10 : vector<1x1x8x8xbf16> to vector<8x8xbf16>
    %12 = arith.extf %11 : vector<8x8xbf16> to vector<8x8xf32>
    %cst_16 = arith.constant -1.000000e+09 : f32
    %13 = vector.broadcast %cst_16 : f32 to vector<8x8xf32>
    %14 = arith.mulf %12, %13 : vector<8x8xf32>
    %15 = vector.shape_cast %14 : vector<8x8xf32> to vector<1x8x8xf32>
    %16 = vector.broadcast %15 : vector<1x8x8xf32> to vector<4x8x8xf32>
    %17 = arith.addf %9, %16 : vector<4x8x8xf32>
    %c0_17 = arith.constant 0 : index
    %c0_18 = arith.constant 0 : index
    %c0_19 = arith.constant 0 : index
    %18 = vector.load %arg8[%c0_17, %c0_18, %c0_19] : memref<4x8x1xf32, #tpu.memory_space<vmem>>, vector<4x8x1xf32>
    %cst_20 = arith.constant dense<0xFF800000> : vector<4x8xf32>
    %19 = vector.multi_reduction <maximumf>, %17, %cst_20 [2] : vector<4x8x8xf32> to vector<4x8xf32>
    %20 = vector.shape_cast %19 : vector<4x8xf32> to vector<4x8x1xf32>
    %21 = arith.maximumf %18, %20 : vector<4x8x1xf32>
    %22 = arith.subf %18, %21 : vector<4x8x1xf32>
    %23 = math.exp %22 : vector<4x8x1xf32>
    %24 = vector.broadcast %21 : vector<4x8x1xf32> to vector<4x8x8xf32>
    %25 = arith.subf %17, %24 : vector<4x8x8xf32>
    %26 = math.exp %25 : vector<4x8x8xf32>
    %c0_21 = arith.constant 0 : index
    %c0_22 = arith.constant 0 : index
    %c0_23 = arith.constant 0 : index
    %27 = vector.load %arg9[%c0_21, %c0_22, %c0_23] : memref<4x8x1xf32, #tpu.memory_space<vmem>>, vector<4x8x1xf32>
    %28 = arith.mulf %23, %27 : vector<4x8x1xf32>
    %cst_24 = arith.constant dense<0.000000e+00> : vector<4x8xf32>
    %29 = vector.multi_reduction <add>, %26, %cst_24 [2] : vector<4x8x8xf32> to vector<4x8xf32>
    %30 = vector.shape_cast %29 : vector<4x8xf32> to vector<4x8x1xf32>
    %31 = arith.addf %28, %30 : vector<4x8x1xf32>
    %c0_25 = arith.constant 0 : index
    %c0_26 = arith.constant 0 : index
    %c0_27 = arith.constant 0 : index
    %32 = vector.load %arg9[%c0_25, %c0_26, %c0_27] : memref<4x8x1xf32, #tpu.memory_space<vmem>>, vector<4x8x1xf32>
    tpu.vector_store %arg9[%c0_25, %c0_26, %c0_27], %31 {strides = array<i32>} : memref<4x8x1xf32, #tpu.memory_space<vmem>>, vector<4x8x1xf32>,
    %c0_28 = arith.constant 0 : index
    %c0_29 = arith.constant 0 : index
    %c0_30 = arith.constant 0 : index
    %33 = vector.load %arg10[%c0_28, %c0_29, %c0_30] : memref<4x8x8xf32, #tpu.memory_space<vmem>>, vector<4x8x8xf32>
    %34 = vector.broadcast %23 : vector<4x8x1xf32> to vector<4x8x8xf32>
    %35 = arith.mulf %34, %33 : vector<4x8x8xf32>
    %36 = arith.truncf %26 : vector<4x8x8xf32> to vector<4x8x8xbf16>
    "tpu.trace_start"() <{level = 10 : i32, message = "hqk,hke->hqe"}> : () -> ()
    %cst_31 = arith.constant dense<0.000000e+00> : vector<4x8x8xf32>
    %37 = tpu.matmul %36, %8, %cst_31 {dimension_numbers = #tpu.dot_dimension_numbers<[2], [1], [1], [2], [0, 0, 0, 1, 1, 2], [0], [0]>} : vector<4x8x8xbf16>, vector<4x8x8xbf16>, vector<4x8x8xf32> -> vector<4x8x8xf32>
    "tpu.trace_stop"() : () -> ()
    %38 = arith.addf %35, %37 : vector<4x8x8xf32>
    %c0_32 = arith.constant 0 : index
    %c0_33 = arith.constant 0 : index
    %c0_34 = arith.constant 0 : index
    %39 = vector.load %arg10[%c0_32, %c0_33, %c0_34] : memref<4x8x8xf32, #tpu.memory_space<vmem>>, vector<4x8x8xf32>
    tpu.vector_store %arg10[%c0_32, %c0_33, %c0_34], %38 {strides = array<i32>} : memref<4x8x8xf32, #tpu.memory_space<vmem>>, vector<4x8x8xf32>,
    %c0_35 = arith.constant 0 : index
    %c0_36 = arith.constant 0 : index
    %c0_37 = arith.constant 0 : index
    %40 = vector.load %arg8[%c0_35, %c0_36, %c0_37] : memref<4x8x1xf32, #tpu.memory_space<vmem>>, vector<4x8x1xf32>
    tpu.vector_store %arg8[%c0_35, %c0_36, %c0_37], %21 {strides = array<i32>} : memref<4x8x1xf32, #tpu.memory_space<vmem>>, vector<4x8x1xf32>,
    %c0_i32_38 = arith.constant 0 : i32
    %41 = arith.cmpi eq, %arg2, %c0_i32_38 : i32
    %42 = arith.extui %41 : i1 to i32
    %c0_i32_39 = arith.constant 0 : i32
    %43 = arith.cmpi ne, %42, %c0_i32_39 : i32
    scf.if %43 {
      %c0_40 = arith.constant 0 : index
      %c0_41 = arith.constant 0 : index
      %c0_42 = arith.constant 0 : index
      %44 = vector.load %arg10[%c0_40, %c0_41, %c0_42] : memref<4x8x8xf32, #tpu.memory_space<vmem>>, vector<4x8x8xf32>
      %c0_43 = arith.constant 0 : index
      %c0_44 = arith.constant 0 : index
      %c0_45 = arith.constant 0 : index
      %45 = vector.load %arg9[%c0_43, %c0_44, %c0_45] : memref<4x8x1xf32, #tpu.memory_space<vmem>>, vector<4x8x1xf32>
      %46 = tpu.reciprocal %45 {approx = true} : vector<4x8x1xf32> -> vector<4x8x1xf32>
      %47 = vector.broadcast %46 : vector<4x8x1xf32> to vector<4x8x8xf32>
      %48 = arith.mulf %44, %47 : vector<4x8x8xf32>
      %49 = arith.truncf %48 : vector<4x8x8xf32> to vector<4x8x8xbf16>
      %c0_46 = arith.constant 0 : index
      %c0_47 = arith.constant 0 : index
      %c0_48 = arith.constant 0 : index
      %c0_49 = arith.constant 0 : index
      %50 = vector.load %arg7[%c0_46, %c0_47, %c0_48, %c0_49] : memref<1x4x8x8xbf16, #tpu.memory_space<vmem>>, vector<1x4x8x8xbf16>
      %51 = vector.shape_cast %50 : vector<1x4x8x8xbf16> to vector<4x8x8xbf16>
      %52 = vector.shape_cast %49 : vector<4x8x8xbf16> to vector<1x4x8x8xbf16>
      tpu.vector_store %arg7[%c0_46, %c0_47, %c0_48, %c0_49], %52 {strides = array<i32>} : memref<1x4x8x8xbf16, #tpu.memory_space<vmem>>, vector<1x4x8x8xbf16>,
    } else {
    }
    return
  }
  func.func @transform_0(%arg0: i32, %arg1: i32, %arg2: i32) -> (i32, i32, i32, i32) {
    %c0_i32 = arith.constant 0 : i32
    %c0_i32_0 = arith.constant 0 : i32
    %c0_i32_1 = arith.constant 0 : i32
    return %arg0, %c0_i32, %arg1, %c0_i32_0 : i32, i32, i32, i32
  }
  func.func @transform_1(%arg0: i32, %arg1: i32, %arg2: i32) -> (i32, i32, i32, i32) {
    %c0_i32 = arith.constant 0 : i32
    %c0_i32_0 = arith.constant 0 : i32
    %c0_i32_1 = arith.constant 0 : i32
    return %arg0, %c0_i32, %arg2, %c0_i32_0 : i32, i32, i32, i32
  }
  func.func @transform_2(%arg0: i32, %arg1: i32, %arg2: i32) -> (i32, i32, i32, i32) {
    %c0_i32 = arith.constant 0 : i32
    %c0_i32_0 = arith.constant 0 : i32
    %c0_i32_1 = arith.constant 0 : i32
    return %arg0, %c0_i32, %arg2, %c0_i32_0 : i32, i32, i32, i32
  }
  func.func @transform_3(%arg0: i32, %arg1: i32, %arg2: i32) -> (i32, i32, i32, i32) {
    %c0_i32 = arith.constant 0 : i32
    %c0_i32_0 = arith.constant 0 : i32
    return %arg0, %c0_i32, %arg1, %arg2 : i32, i32, i32, i32
  }
  func.func @transform_4(%arg0: i32, %arg1: i32, %arg2: i32) -> (i32, i32, i32, i32) {
    %c0_i32 = arith.constant 0 : i32
    %c0_i32_0 = arith.constant 0 : i32
    %c0_i32_1 = arith.constant 0 : i32
    return %arg0, %c0_i32, %arg1, %c0_i32_0 : i32, i32, i32, i32
  }
}

module attributes {stable_mosaic.version = 11 : i64} {
  func.func @_linear_kernel(%arg0: i32, %arg1: memref<16x32xbf16, #tpu.memory_space<vmem>>, %arg2: memref<32x32xbf16, #tpu.memory_space<vmem>>, %arg3: memref<1x32xf32, #tpu.memory_space<vmem>>, %arg4: memref<16x32xf32, #tpu.memory_space<vmem>>) attributes {dimension_semantics = [#tpu.dimension_semantics<parallel>], iteration_bounds = array<i64: 1>, scalar_prefetch = 0 : i64, scratch_operands = 0 : i64, tpu.core_type = #tpu.core_type<tc>, window_params = [{transform_indices = @transform_0, window_bounds = array<i64: 16, 32>}, {pipeline_mode = #tpu.pipeline_mode<synchronous>, transform_indices = @transform_1, window_bounds = array<i64: 32, 32>}, {pipeline_mode = #tpu.pipeline_mode<synchronous>, transform_indices = @transform_2, window_bounds = array<i64: 1, 32>}, {transform_indices = @transform_3, window_bounds = array<i64: 16, 32>}]} {
    %c0 = arith.constant 0 : index
    %c0_0 = arith.constant 0 : index
    %0 = vector.load %arg1[%c0, %c0_0] : memref<16x32xbf16, #tpu.memory_space<vmem>>, vector<16x32xbf16>
    %c0_1 = arith.constant 0 : index
    %c0_2 = arith.constant 0 : index
    %1 = vector.load %arg2[%c0_1, %c0_2] : memref<32x32xbf16, #tpu.memory_space<vmem>>, vector<32x32xbf16>
    %cst = arith.constant dense<0.000000e+00> : vector<16x32xf32>
    %2 = tpu.matmul %0, %1, %cst {dimension_numbers = #tpu.dot_dimension_numbers<[1], [0], [0], [1], [0, 0, 1, 1], [], []>} : vector<16x32xbf16>, vector<32x32xbf16>, vector<16x32xf32> -> vector<16x32xf32>
    %c0_3 = arith.constant 0 : index
    %c0_4 = arith.constant 0 : index
    %3 = vector.load %arg3[%c0_3, %c0_4] : memref<1x32xf32, #tpu.memory_space<vmem>>, vector<1x32xf32>
    %4 = vector.broadcast %3 : vector<1x32xf32> to vector<16x32xf32>
    %5 = arith.addf %2, %4 : vector<16x32xf32>
    %c0_5 = arith.constant 0 : index
    %c0_6 = arith.constant 0 : index
    %6 = vector.load %arg4[%c0_5, %c0_6] : memref<16x32xf32, #tpu.memory_space<vmem>>, vector<16x32xf32>
    tpu.vector_store %arg4[%c0_5, %c0_6], %5 {strides = array<i32>} : memref<16x32xf32, #tpu.memory_space<vmem>>, vector<16x32xf32>,
    return
  }
  func.func @transform_0(%arg0: i32) -> (i32, i32) {
    %c0_i32 = arith.constant 0 : i32
    %c0_i32_0 = arith.constant 0 : i32
    return %arg0, %c0_i32 : i32, i32
  }
  func.func @transform_1(%arg0: i32) -> (i32, i32) {
    %c0_i32 = arith.constant 0 : i32
    %c0_i32_0 = arith.constant 0 : i32
    %c0_i32_1 = arith.constant 0 : i32
    return %c0_i32, %c0_i32_0 : i32, i32
  }
  func.func @transform_2(%arg0: i32) -> (i32, i32) {
    %c0_i32 = arith.constant 0 : i32
    %c0_i32_0 = arith.constant 0 : i32
    %c0_i32_1 = arith.constant 0 : i32
    return %c0_i32, %c0_i32_0 : i32, i32
  }
  func.func @transform_3(%arg0: i32) -> (i32, i32) {
    %c0_i32 = arith.constant 0 : i32
    %c0_i32_0 = arith.constant 0 : i32
    return %arg0, %c0_i32 : i32, i32
  }
}

</mosaic_0001>

<llo_original>
// kernel: multi_head_attention.7
$region0: #{multi_head_attention.7}
  #allocation0 [shape = 'u32[]', space=smem, size = 0x4, offset = 0x4, fixed_abs, tag = 'smem constant byte address 0x4 - core index']
  #allocation1 [shape = 'u32[72,128]{1,0:T(1,128)}', space=vmem, size = 0x9000, scoped, tag = 'internal scratch']
  %s0 = inlined_call_operand.vmem [shape: bf16[16,32], index: 0, kind: input, shape index: {}]
  %s1 = inlined_call_operand.vmem [shape: bf16[32,32], index: 1, kind: input, shape index: {}]
  %s2 = inlined_call_operand.hbm [shape: f32[1,32], index: 2, kind: input, shape index: {}]
  %s3 = inlined_call_operand.vmem [shape: bf16[16,32], index: 3, kind: output, shape index: {}]
  %s4 = sld [smem:[#allocation0]]
  $region26: #{multi_head_attention.7} parent=0
    _
  %s6 = ssub.s32 1, %s4
  %s7 = scalar_select 0, %s6, %s4
  $region1: #{multi_head_attention.7} parent=0
    #allocation2 [shape = 'u8[512]{0}', space=vmem, size = 0x400, scoped, tag = 'input window, operand 2, single buffered']
    #allocation3 [shape = 's32[1]{0}', space=sflag, size = 0x4, scoped, tag = 'scoped memory for multi_head_attention.7']
    %8 = vsyncpa [#allocation3], 0
    // Predicated region
    $region2: #{multi_head_attention.7} parent=1 // pred_check
      _
    $region3: #{multi_head_attention.7} parent=1 // pred_check_branch
      %10 = sbr.rel (0) target = $region5
    $region4: #{multi_head_attention.7} parent=1 // pred_region
      _
    $region5: #{multi_head_attention.7} parent=1 // pred_fallthru
      _
    // Predicated region
    $region6: #{multi_head_attention.7} parent=1 // pred_check
      _
    $region7: #{multi_head_attention.7} parent=1 // pred_check_branch
      %12 = sbr.rel (0) target = $region9
    $region8: #{multi_head_attention.7} parent=1 // pred_region
      _
    $region9: #{multi_head_attention.7} parent=1 // pred_fallthru
      _
    // Predicated region
    $region10: #{multi_head_attention.7} parent=1 // pred_check
      _
    $region11: #{multi_head_attention.7} parent=1 // pred_check_branch
      %14 = sbr.rel (0) target = $region13
    $region12: #{multi_head_attention.7} parent=1 // pred_region
      %16 = vsyncadd [#allocation3], 0
      %s18 = sshll.u32 %s2, 4
      %s19 = int_to_ptr.hbm [resolvable:$true] %s18
      %s20 = sshll.u32 [#allocation2], 4
      %s21 = int_to_ptr.vmem [resolvable:$true] %s20
      %23 = dma.hbm_to_vmem [thread:$0]  %s19, 16, %s21, [#allocation3]
    $region13: #{multi_head_attention.7} parent=1 // pred_fallthru
      _
    // Predicated region
    $region14: #{multi_head_attention.7} parent=1 // pred_check
      _
    $region15: #{multi_head_attention.7} parent=1 // pred_check_branch
      %25 = sbr.rel (0) target = $region17
    $region16: #{multi_head_attention.7} parent=1 // pred_region
      %27 = dma.done [#allocation3], 16
    $region17: #{multi_head_attention.7} parent=1 // pred_fallthru
      _
    %v29 = vld [vmem:[%s0] sm:$0xf]
    %v30 = vld [vmem:[%s0 + $0x4] sm:$0xf]
    %v31 = vld [vmem:[%s1] sm:$0xf]
    %v32 = vld [vmem:[%s1 + $0x4] sm:$0xf]
    %v33 = vld [vmem:[%s1 + $0x8] sm:$0xf]
    %v34 = vld [vmem:[%s1 + $0xc] sm:$0xf]
    %v35 = vld [vmem:[#allocation2] sm:$0x1]
    %v37 = vperm.slane %v35, 0
    %v41 = vunpack.c.l.b16 %v29
    %v42 = vunpack.c.l.b16 %v30
    %v43 = vpack.c.b16 %v42, %v41
    %v48 = vunpack.c.l.b16 %v31
    %v49 = vunpack.c.l.b16 %v32
    %v50 = vunpack.c.l.b16 %v33
    %v51 = vunpack.c.l.b16 %v34
    %v52 = vpack.c.b16 %v49, %v48
    %v53 = vpack.c.b16 %v51, %v50
    %vm56 = vcmask 261120
    %v58 = vsel %vm56, %v43, 0
    %60 = vmatpush.bf16.msra.mxu0 0
    %61 = vmatpush.bf16.msra.mxu0 0
    %62 = vmatpush.bf16.msra.mxu0 0
    %63 = vmatpush.bf16.msra.mxu0 0
    %64 = vmatpush.bf16.msra.mxu0 0
    %65 = vmatpush.bf16.msra.mxu0 0
    %66 = vmatpush.bf16.msra.mxu0 %v53
    %67 = vmatpush.bf16.msra.mxu0 %v52
    %68 = vmatmul.bf16.gmra.mxu0 %v58
    %v69 = vpop.f32.mrf.mxu0
    %v70 = vadd.f32 %v37, %v69
    %v71 = vpop.f32.mrf.mxu0
    %v72 = vadd.f32 %v37, %v71
    %73 = vdwg.mxu0
    %v74 = vpack.c.bf16 %v70, %v70
    %v75 = vpack.c.bf16 %v72, %v72
    %vm76 = vcmask 257024
    %77 = vst.msk [vmem:[%s3] sm:$0xf] %vm76, %v74
    %78 = vst.msk [vmem:[%s3 + $0x4] sm:$0xf] %vm76, %v75
    // Predicated region
    $region18: #{multi_head_attention.7} parent=1 // pred_check
      _
    $region19: #{multi_head_attention.7} parent=1 // pred_check_branch
      %80 = sbr.rel (0) target = $region21
    $region20: #{multi_head_attention.7} parent=1 // pred_region
      _
    $region21: #{multi_head_attention.7} parent=1 // pred_fallthru
      _
    // Predicated region
    $region22: #{multi_head_attention.7} parent=1 // pred_check
      _
    $region23: #{multi_head_attention.7} parent=1 // pred_check_branch
      %82 = sbr.rel (0) target = $region25
    $region24: #{multi_head_attention.7} parent=1 // pred_region
      _
    $region25: #{multi_head_attention.7} parent=1 // pred_fallthru
      _
    %83 = vsyncpa [#allocation3], 1

// kernel: multi_head_attention.6
$region0: #{multi_head_attention.6}
  #allocation0 [shape = 'u32[]', space=smem, size = 0x4, offset = 0x4, fixed_abs, tag = 'smem constant byte address 0x4 - core index']
  #allocation1 [shape = 'u32[72,128]{1,0:T(1,128)}', space=vmem, size = 0x9000, scoped, tag = 'internal scratch']
  %s0 = inlined_call_operand.vmem [shape: bf16[16,32], index: 0, kind: input, shape index: {}]
  %s1 = inlined_call_operand.hbm [shape: bf16[32,32], index: 1, kind: input, shape index: {}]
  %s2 = inlined_call_operand.vmem [shape: f32[1,32], index: 2, kind: input, shape index: {}]
  %s3 = inlined_call_operand.vmem [shape: bf16[16,32], index: 3, kind: output, shape index: {}]
  %s4 = sld [smem:[#allocation0]]
  $region26: #{multi_head_attention.6} parent=0
    _
  %s6 = ssub.s32 1, %s4
  %s7 = scalar_select 0, %s6, %s4
  $region1: #{multi_head_attention.6} parent=0
    #allocation2 [shape = 'u8[8192]{0}', space=vmem, size = 0x2000, scoped, tag = 'input window, operand 1, single buffered']
    #allocation3 [shape = 's32[1]{0}', space=sflag, size = 0x4, scoped, tag = 'scoped memory for multi_head_attention.6']
    %8 = vsyncpa [#allocation3], 0
    // Predicated region
    $region2: #{multi_head_attention.6} parent=1 // pred_check
      _
    $region3: #{multi_head_attention.6} parent=1 // pred_check_branch
      %10 = sbr.rel (0) target = $region5
    $region4: #{multi_head_attention.6} parent=1 // pred_region
      _
    $region5: #{multi_head_attention.6} parent=1 // pred_fallthru
      _
    // Predicated region
    $region6: #{multi_head_attention.6} parent=1 // pred_check
      _
    $region7: #{multi_head_attention.6} parent=1 // pred_check_branch
      %12 = sbr.rel (0) target = $region9
    $region8: #{multi_head_attention.6} parent=1 // pred_region
      %14 = vsyncadd [#allocation3], 0
      %s15 = sshll.u32 %s1, 4
      %s16 = int_to_ptr.hbm [resolvable:$true] %s15
      %s17 = sshll.u32 [#allocation2], 4
      %s18 = int_to_ptr.vmem [resolvable:$true] %s17
      %23 = dma.hbm_to_vmem [thread:$0]  %s16, 256, %s18, [#allocation3], 64, 64, 4
    $region9: #{multi_head_attention.6} parent=1 // pred_fallthru
      _
    // Predicated region
    $region10: #{multi_head_attention.6} parent=1 // pred_check
      _
    $region11: #{multi_head_attention.6} parent=1 // pred_check_branch
      %25 = sbr.rel (0) target = $region13
    $region12: #{multi_head_attention.6} parent=1 // pred_region
      _
    $region13: #{multi_head_attention.6} parent=1 // pred_fallthru
      _
    // Predicated region
    $region14: #{multi_head_attention.6} parent=1 // pred_check
      _
    $region15: #{multi_head_attention.6} parent=1 // pred_check_branch
      %27 = sbr.rel (0) target = $region17
    $region16: #{multi_head_attention.6} parent=1 // pred_region
      %29 = dma.done [#allocation3], 256
    $region17: #{multi_head_attention.6} parent=1 // pred_fallthru
      _
    %v31 = vld [vmem:[%s0] sm:$0xf]
    %v32 = vld [vmem:[%s0 + $0x4] sm:$0xf]
    %v33 = vld [vmem:[#allocation2] sm:$0xf]
    %v34 = vld [vmem:[#allocation2 + $0x4] sm:$0xf]
    %v35 = vld [vmem:[#allocation2 + $0x8] sm:$0xf]
    %v36 = vld [vmem:[#allocation2 + $0xc] sm:$0xf]
    %v37 = vld [vmem:[%s2] sm:$0x1]
    %v39 = vperm.slane %v37, 0
    %v43 = vunpack.c.l.b16 %v31
    %v44 = vunpack.c.l.b16 %v32
    %v45 = vpack.c.b16 %v44, %v43
    %v50 = vunpack.c.l.b16 %v33
    %v51 = vunpack.c.l.b16 %v34
    %v52 = vunpack.c.l.b16 %v35
    %v53 = vunpack.c.l.b16 %v36
    %v54 = vpack.c.b16 %v51, %v50
    %v55 = vpack.c.b16 %v53, %v52
    %vm58 = vcmask 261120
    %v60 = vsel %vm58, %v45, 0
    %62 = vmatpush.bf16.msra.mxu0 0
    %63 = vmatpush.bf16.msra.mxu0 0
    %64 = vmatpush.bf16.msra.mxu0 0
    %65 = vmatpush.bf16.msra.mxu0 0
    %66 = vmatpush.bf16.msra.mxu0 0
    %67 = vmatpush.bf16.msra.mxu0 0
    %68 = vmatpush.bf16.msra.mxu0 %v55
    %69 = vmatpush.bf16.msra.mxu0 %v54
    %70 = vmatmul.bf16.gmra.mxu0 %v60
    %v71 = vpop.f32.mrf.mxu0
    %v72 = vadd.f32 %v39, %v71
    %v73 = vpop.f32.mrf.mxu0
    %v74 = vadd.f32 %v39, %v73
    %75 = vdwg.mxu0
    %v76 = vpack.c.bf16 %v72, %v72
    %v77 = vpack.c.bf16 %v74, %v74
    %vm78 = vcmask 257024
    %79 = vst.msk [vmem:[%s3] sm:$0xf] %vm78, %v76
    %80 = vst.msk [vmem:[%s3 + $0x4] sm:$0xf] %vm78, %v77
    // Predicated region
    $region18: #{multi_head_attention.6} parent=1 // pred_check
      _
    $region19: #{multi_head_attention.6} parent=1 // pred_check_branch
      %82 = sbr.rel (0) target = $region21
    $region20: #{multi_head_attention.6} parent=1 // pred_region
      _
    $region21: #{multi_head_attention.6} parent=1 // pred_fallthru
      _
    // Predicated region
    $region22: #{multi_head_attention.6} parent=1 // pred_check
      _
    $region23: #{multi_head_attention.6} parent=1 // pred_check_branch
      %84 = sbr.rel (0) target = $region25
    $region24: #{multi_head_attention.6} parent=1 // pred_region
      _
    $region25: #{multi_head_attention.6} parent=1 // pred_fallthru
      _
    %85 = vsyncpa [#allocation3], 1

// kernel: multi_head_attention.5
$region0: #{multi_head_attention.5}
  #allocation0 [shape = 'u32[]', space=smem, size = 0x4, offset = 0x4, fixed_abs, tag = 'smem constant byte address 0x4 - core index']
  #allocation1 [shape = 'u32[72,128]{1,0:T(1,128)}', space=vmem, size = 0x9000, scoped, tag = 'internal scratch']
  %s0 = inlined_call_operand.vmem [shape: bf16[16,32], index: 0, kind: input, shape index: {}]
  %s1 = inlined_call_operand.vmem [shape: bf16[32,32], index: 1, kind: input, shape index: {}]
  %s2 = inlined_call_operand.vmem [shape: f32[1,32], index: 2, kind: input, shape index: {}]
  %s3 = inlined_call_operand.vmem [shape: bf16[16,32], index: 3, kind: output, shape index: {}]
  %s4 = sld [smem:[#allocation0]]
  $region22: #{multi_head_attention.5} parent=0
    _
  %s6 = ssub.s32 1, %s4
  %s7 = scalar_select 0, %s6, %s4
  // Predicated region
  $region2: #{multi_head_attention.5} parent=0 // pred_check
    _
  $region3: #{multi_head_attention.5} parent=0 // pred_check_branch
    %9 = sbr.rel (0) target = $region5
  $region4: #{multi_head_attention.5} parent=0 // pred_region
    _
  $region5: #{multi_head_attention.5} parent=0 // pred_fallthru
    _
  // Predicated region
  $region6: #{multi_head_attention.5} parent=0 // pred_check
    _
  $region7: #{multi_head_attention.5} parent=0 // pred_check_branch
    %11 = sbr.rel (0) target = $region9
  $region8: #{multi_head_attention.5} parent=0 // pred_region
    _
  $region9: #{multi_head_attention.5} parent=0 // pred_fallthru
    _
  // Predicated region
  $region10: #{multi_head_attention.5} parent=0 // pred_check
    _
  $region11: #{multi_head_attention.5} parent=0 // pred_check_branch
    %13 = sbr.rel (0) target = $region13
  $region12: #{multi_head_attention.5} parent=0 // pred_region
    _
  $region13: #{multi_head_attention.5} parent=0 // pred_fallthru
    _
  %v15 = vld [vmem:[%s0] sm:$0xf]
  %v16 = vld [vmem:[%s0 + $0x4] sm:$0xf]
  %v17 = vld [vmem:[%s1] sm:$0xf]
  %v18 = vld [vmem:[%s1 + $0x4] sm:$0xf]
  %v19 = vld [vmem:[%s1 + $0x8] sm:$0xf]
  %v20 = vld [vmem:[%s1 + $0xc] sm:$0xf]
  %v21 = vld [vmem:[%s2] sm:$0x1]
  %v23 = vperm.slane %v21, 0
  %v27 = vunpack.c.l.b16 %v15
  %v28 = vunpack.c.l.b16 %v16
  %v29 = vpack.c.b16 %v28, %v27
  %v34 = vunpack.c.l.b16 %v17
  %v35 = vunpack.c.l.b16 %v18
  %v36 = vunpack.c.l.b16 %v19
  %v37 = vunpack.c.l.b16 %v20
  %v38 = vpack.c.b16 %v35, %v34
  %v39 = vpack.c.b16 %v37, %v36
  %vm42 = vcmask 261120
  %v44 = vsel %vm42, %v29, 0
  %46 = vmatpush.bf16.msra.mxu0 0
  %47 = vmatpush.bf16.msra.mxu0 0
  %48 = vmatpush.bf16.msra.mxu0 0
  %49 = vmatpush.bf16.msra.mxu0 0
  %50 = vmatpush.bf16.msra.mxu0 0
  %51 = vmatpush.bf16.msra.mxu0 0
  %52 = vmatpush.bf16.msra.mxu0 %v39
  %53 = vmatpush.bf16.msra.mxu0 %v38
  %54 = vmatmul.bf16.gmra.mxu0 %v44
  %v55 = vpop.f32.mrf.mxu0
  %v56 = vadd.f32 %v23, %v55
  %v57 = vpop.f32.mrf.mxu0
  %v58 = vadd.f32 %v23, %v57
  %59 = vdwg.mxu0
  %v60 = vpack.c.bf16 %v56, %v56
  %v61 = vpack.c.bf16 %v58, %v58
  %vm62 = vcmask 257024
  %63 = vst.msk [vmem:[%s3] sm:$0xf] %vm62, %v60
  %64 = vst.msk [vmem:[%s3 + $0x4] sm:$0xf] %vm62, %v61
  // Predicated region
  $region14: #{multi_head_attention.5} parent=0 // pred_check
    _
  $region15: #{multi_head_attention.5} parent=0 // pred_check_branch
    %66 = sbr.rel (0) target = $region17
  $region16: #{multi_head_attention.5} parent=0 // pred_region
    _
  $region17: #{multi_head_attention.5} parent=0 // pred_fallthru
    _
  // Predicated region
  $region18: #{multi_head_attention.5} parent=0 // pred_check
    _
  $region19: #{multi_head_attention.5} parent=0 // pred_check_branch
    %68 = sbr.rel (0) target = $region21
  $region20: #{multi_head_attention.5} parent=0 // pred_region
    _
  $region21: #{multi_head_attention.5} parent=0 // pred_fallthru
    _

// kernel: multi_head_attention.9
$region0: #{multi_head_attention.9}
  #allocation0 [shape = 'u32[]', space=smem, size = 0x4, offset = 0x4, fixed_abs, tag = 'smem constant byte address 0x4 - core index']
  #allocation1 [shape = 'u32[72,128]{1,0:T(1,128)}', space=vmem, size = 0x9000, scoped, tag = 'internal scratch']
  %s0 = inlined_call_operand.vmem [shape: bf16[16,32], index: 0, kind: input, shape index: {}]
  %s1 = inlined_call_operand.vmem [shape: bf16[32,32], index: 1, kind: input, shape index: {}]
  %s2 = inlined_call_operand.vmem [shape: f32[1,32], index: 2, kind: input, shape index: {}]
  %s3 = inlined_call_operand.hbm [shape: f32[16,32], index: 3, kind: output, shape index: {}]
  %s4 = sld [smem:[#allocation0]]
  $region22: #{multi_head_attention.9} parent=0
    _
  %s6 = ssub.s32 1, %s4
  %s7 = scalar_select 0, %s6, %s4
  $region1: #{multi_head_attention.9} parent=0
    #allocation2 [shape = 'u8[8192]{0}', space=vmem, size = 0x2000, scoped, tag = 'output window, operand 0, single buffered']
    #allocation3 [shape = 's32[1]{0}', space=sflag, size = 0x4, scoped, tag = 'scoped memory for multi_head_attention.9']
    %8 = vsyncpa [#allocation3], 0
    // Predicated region
    $region2: #{multi_head_attention.9} parent=1 // pred_check
      _
    $region3: #{multi_head_attention.9} parent=1 // pred_check_branch
      %10 = sbr.rel (0) target = $region5
    $region4: #{multi_head_attention.9} parent=1 // pred_region
      _
    $region5: #{multi_head_attention.9} parent=1 // pred_fallthru
      _
    // Predicated region
    $region6: #{multi_head_attention.9} parent=1 // pred_check
      _
    $region7: #{multi_head_attention.9} parent=1 // pred_check_branch
      %12 = sbr.rel (0) target = $region9
    $region8: #{multi_head_attention.9} parent=1 // pred_region
      _
    $region9: #{multi_head_attention.9} parent=1 // pred_fallthru
      _
    // Predicated region
    $region10: #{multi_head_attention.9} parent=1 // pred_check
      _
    $region11: #{multi_head_attention.9} parent=1 // pred_check_branch
      %14 = sbr.rel (0) target = $region13
    $region12: #{multi_head_attention.9} parent=1 // pred_region
      _
    $region13: #{multi_head_attention.9} parent=1 // pred_fallthru
      _
    %v16 = vld [vmem:[%s0] sm:$0xf]
    %v17 = vld [vmem:[%s0 + $0x4] sm:$0xf]
    %v18 = vld [vmem:[%s1] sm:$0xf]
    %v19 = vld [vmem:[%s1 + $0x4] sm:$0xf]
    %v20 = vld [vmem:[%s1 + $0x8] sm:$0xf]
    %v21 = vld [vmem:[%s1 + $0xc] sm:$0xf]
    %v22 = vld [vmem:[%s2] sm:$0x1]
    %v24 = vperm.slane %v22, 0
    %v28 = vunpack.c.l.b16 %v16
    %v29 = vunpack.c.l.b16 %v17
    %v30 = vpack.c.b16 %v29, %v28
    %v35 = vunpack.c.l.b16 %v18
    %v36 = vunpack.c.l.b16 %v19
    %v37 = vunpack.c.l.b16 %v20
    %v38 = vunpack.c.l.b16 %v21
    %v39 = vpack.c.b16 %v36, %v35
    %v40 = vpack.c.b16 %v38, %v37
    %vm43 = vcmask 261120
    %v45 = vsel %vm43, %v30, 0
    %47 = vmatpush.bf16.msra.mxu0 0
    %48 = vmatpush.bf16.msra.mxu0 0
    %49 = vmatpush.bf16.msra.mxu0 0
    %50 = vmatpush.bf16.msra.mxu0 0
    %51 = vmatpush.bf16.msra.mxu0 0
    %52 = vmatpush.bf16.msra.mxu0 0
    %53 = vmatpush.bf16.msra.mxu0 %v40
    %54 = vmatpush.bf16.msra.mxu0 %v39
    %55 = vmatmul.bf16.gmra.mxu0 %v45
    %v56 = vpop.f32.mrf.mxu0
    %v57 = vadd.f32 %v24, %v56
    %v58 = vpop.f32.mrf.mxu0
    %v59 = vadd.f32 %v24, %v58
    %60 = vdwg.mxu0
    %61 = vst.msk [vmem:[#allocation2] sm:$0xff] %vm43, %v57
    %62 = vst.msk [vmem:[#allocation2 + $0x8] sm:$0xff] %vm43, %v59
    // Predicated region
    $region14: #{multi_head_attention.9} parent=1 // pred_check
      _
    $region15: #{multi_head_attention.9} parent=1 // pred_check_branch
      %64 = sbr.rel (0) target = $region17
    $region16: #{multi_head_attention.9} parent=1 // pred_region
      %66 = vsyncadd [#allocation3], 0
      %s67 = sshll.u32 [#allocation2], 4
      %s68 = int_to_ptr.vmem [resolvable:$true] %s67
      %s69 = sshll.u32 %s3, 4
      %s70 = int_to_ptr.hbm [resolvable:$true] %s69
      %75 = dma.vmem_to_hbm [thread:$0]  %s68, 256, %s70, [#allocation3], 128, 128, 8
    $region17: #{multi_head_attention.9} parent=1 // pred_fallthru
      _
    // Predicated region
    $region18: #{multi_head_attention.9} parent=1 // pred_check
      _
    $region19: #{multi_head_attention.9} parent=1 // pred_check_branch
      %77 = sbr.rel (0) target = $region21
    $region20: #{multi_head_attention.9} parent=1 // pred_region
      %79 = dma.done [#allocation3], 256
    $region21: #{multi_head_attention.9} parent=1 // pred_fallthru
      _
    %80 = vsyncpa [#allocation3], 1

// kernel: multi_head_attention.8
$region0: #{multi_head_attention.8}
  #allocation0 [shape = 'u32[]', space=smem, size = 0x4, offset = 0x4, fixed_abs, tag = 'smem constant byte address 0x4 - core index']
  #allocation1 [shape = 'u32[72,128]{1,0:T(1,128)}', space=vmem, size = 0x9000, scoped, tag = 'internal scratch']
  #allocation2 [shape = 'f32[4,8,1]{2,1,0:T(8,128)}', space=vmem, size = 0x4000, scoped, tag = 'scratch operand']
  #allocation3 [shape = 'f32[4,8,1]{2,1,0:T(8,128)}', space=vmem, size = 0x4000, scoped, tag = 'scratch operand']
  #allocation4 [shape = 'f32[4,8,8]{2,1,0:T(8,128)}', space=vmem, size = 0x4000, scoped, tag = 'scratch operand']
  %s0 = inlined_call_operand.vmem [shape: bf16[2,4,8,8], index: 0, kind: input, shape index: {}]
  %s1 = inlined_call_operand.vmem [shape: bf16[2,4,8,8], index: 1, kind: input, shape index: {}]
  %s2 = inlined_call_operand.vmem [shape: bf16[2,4,8,8], index: 2, kind: input, shape index: {}]
  %s3 = inlined_call_operand.vmem [shape: bf16[2,1,8,8], index: 3, kind: input, shape index: {}]
  %s4 = inlined_call_operand.vmem [shape: bf16[2,4,8,8], index: 4, kind: output, shape index: {}]
  %s5 = sld [smem:[#allocation0]]
  $region57: #{multi_head_attention.8} parent=0
    _
  %s7 = ssub.s32 1, %s5
  %s8 = scalar_select 0, %s7, %s5
  loop: start=0, step=1, limit=4
  $region2: #{multi_head_attention.8} parent=0 // loop_pre_header
    _
  $region3: #{multi_head_attention.8} parent=0 // loop_header
    %s10 = sphi 0, %s14
    %p11 = scmp.ge.s32.totalorder %s10, 4
    %s17 = sphi 0, %s36
    %s18 = sphi 0, %s32
    %s19 = sphi 0, %s28
    %s20 = sphi 0, %s17
    %s21 = sphi 0, %s18
    %s22 = sphi 0, %s19
    %s23 = sphi 0, %s20
    %s24 = sphi 0, %s21
    %s25 = sphi 0, %s22
    %s41 = sphi 0, %s43
    %s44 = sphi 0, %s41
    %s45 = sphi 0, %s44
    %s61 = sphi 0, %s45
    %s69 = sphi 0, %s71
    %s72 = sphi 0, %s69
    %s73 = sphi 0, %s72
    %s89 = sphi 0, %s73
    %s97 = sphi 0, %s99
    %s100 = sphi 0, %s97
    %s101 = sphi 0, %s100
    %s117 = sphi 0, %s101
    %s127 = sphi 0, %s129
    %s130 = sphi 0, %s127
    %s131 = sphi 0, %s130
    %s147 = sphi 0, %s131
    %s155 = sphi 0, %s157
    %s158 = sphi 0, %s155
    %s159 = sphi 0, %s158
    %s175 = sphi 0, %s159
  $region4: #{multi_head_attention.8} parent=0 // loop_header_branch
    %13 = sbr.rel (%p11) target = $region8
  $region5: #{multi_head_attention.8} parent=0 // loop_body
    %s15 = ssub.s32 %s10, 1
    %s16 = ssub.s32 %s10, 2
    %s26 = sadd.s32 1, %s19
    %p27 = scmp.ge.s32.totalorder %s26, 1
    %s28 = scalar_select %p27, 0, %s26
    %s29 = sadd.s32 1, %s18
    %s30 = scalar_select %p27, %s29, %s18
    %p31 = scmp.ge.s32.totalorder %s30, 1
    %s32 = scalar_select %p31, 0, %s30
    %s33 = sadd.s32 1, %s17
    %s34 = scalar_select %p31, %s33, %s17
    %p35 = scmp.ge.s32.totalorder %s34, 2
    %s36 = scalar_select %p35, 0, %s34
    %s37 = ssub.s32 %s17, %s36
    %s38 = ssub.s32 %s18, %s32
    %s39 = sor.u32 %s37, %s38
    %p40 = scmp.eq.s32.totalorder %s39, 0
    %s42 = sadd.s32 %s41, 1
    %s43 = scalar_select %p40, %s41, %s42
    %p46 = pneg %p40
    %p47 = scmp.eq.s32.totalorder %s10, 1
    %p48 = por %p46, %p47
    %p49 = scmp.ne.s32.totalorder %s41, %s44
    %p50 = scmp.eq.s32.totalorder %s10, 0
    %p51 = por %p49, %p50
    %p52 = scmp.ne.s32.totalorder %s41, %s44
    %p53 = scmp.eq.s32.totalorder %s15, 1
    %p54 = por %p52, %p53
    %p55 = scmp.ne.s32.totalorder %s44, %s45
    %p56 = scmp.eq.s32.totalorder %s15, 0
    %p57 = por %p55, %p56
    %p58 = scmp.ne.s32.totalorder %s44, %s45
    %p59 = scmp.eq.s32.totalorder %s16, 1
    %p60 = por %p58, %p59
    %p62 = scmp.ne.s32.totalorder %s45, %s61
    %p63 = scmp.eq.s32.totalorder %s16, 0
    %p64 = por %p62, %p63
    %s65 = ssub.s32 %s17, %s36
    %s66 = ssub.s32 %s19, %s28
    %s67 = sor.u32 %s65, %s66
    %p68 = scmp.eq.s32.totalorder %s67, 0
    %s70 = sadd.s32 %s69, 1
    %s71 = scalar_select %p68, %s69, %s70
    %p74 = pneg %p68
    %p75 = scmp.eq.s32.totalorder %s10, 1
    %p76 = por %p74, %p75
    %p77 = scmp.ne.s32.totalorder %s69, %s72
    %p78 = scmp.eq.s32.totalorder %s10, 0
    %p79 = por %p77, %p78
    %p80 = scmp.ne.s32.totalorder %s69, %s72
    %p81 = scmp.eq.s32.totalorder %s15, 1
    %p82 = por %p80, %p81
    %p83 = scmp.ne.s32.totalorder %s72, %s73
    %p84 = scmp.eq.s32.totalorder %s15, 0
    %p85 = por %p83, %p84
    %p86 = scmp.ne.s32.totalorder %s72, %s73
    %p87 = scmp.eq.s32.totalorder %s16, 1
    %p88 = por %p86, %p87
    %p90 = scmp.ne.s32.totalorder %s73, %s89
    %p91 = scmp.eq.s32.totalorder %s16, 0
    %p92 = por %p90, %p91
    %s93 = ssub.s32 %s17, %s36
    %s94 = ssub.s32 %s19, %s28
    %s95 = sor.u32 %s93, %s94
    %p96 = scmp.eq.s32.totalorder %s95, 0
    %s98 = sadd.s32 %s97, 1
    %s99 = scalar_select %p96, %s97, %s98
    %p102 = pneg %p96
    %p103 = scmp.eq.s32.totalorder %s10, 1
    %p104 = por %p102, %p103
    %p105 = scmp.ne.s32.totalorder %s97, %s100
    %p106 = scmp.eq.s32.totalorder %s10, 0
    %p107 = por %p105, %p106
    %p108 = scmp.ne.s32.totalorder %s97, %s100
    %p109 = scmp.eq.s32.totalorder %s15, 1
    %p110 = por %p108, %p109
    %p111 = scmp.ne.s32.totalorder %s100, %s101
    %p112 = scmp.eq.s32.totalorder %s15, 0
    %p113 = por %p111, %p112
    %p114 = scmp.ne.s32.totalorder %s100, %s101
    %p115 = scmp.eq.s32.totalorder %s16, 1
    %p116 = por %p114, %p115
    %p118 = scmp.ne.s32.totalorder %s101, %s117
    %p119 = scmp.eq.s32.totalorder %s16, 0
    %p120 = por %p118, %p119
    %s121 = ssub.s32 %s17, %s36
    %s122 = ssub.s32 %s18, %s32
    %s123 = sor.u32 %s121, %s122
    %s124 = ssub.s32 %s19, %s28
    %s125 = sor.u32 %s123, %s124
    %p126 = scmp.eq.s32.totalorder %s125, 0
    %s128 = sadd.s32 %s127, 1
    %s129 = scalar_select %p126, %s127, %s128
    %p132 = pneg %p126
    %p133 = scmp.eq.s32.totalorder %s10, 1
    %p134 = por %p132, %p133
    %p135 = scmp.ne.s32.totalorder %s127, %s130
    %p136 = scmp.eq.s32.totalorder %s10, 0
    %p137 = por %p135, %p136
    %p138 = scmp.ne.s32.totalorder %s127, %s130
    %p139 = scmp.eq.s32.totalorder %s15, 1
    %p140 = por %p138, %p139
    %p141 = scmp.ne.s32.totalorder %s130, %s131
    %p142 = scmp.eq.s32.totalorder %s15, 0
    %p143 = por %p141, %p142
    %p144 = scmp.ne.s32.totalorder %s130, %s131
    %p145 = scmp.eq.s32.totalorder %s16, 1
    %p146 = por %p144, %p145
    %p148 = scmp.ne.s32.totalorder %s131, %s147
    %p149 = scmp.eq.s32.totalorder %s16, 0
    %p150 = por %p148, %p149
    %s151 = ssub.s32 %s17, %s36
    %s152 = ssub.s32 %s18, %s32
    %s153 = sor.u32 %s151, %s152
    %p154 = scmp.eq.s32.totalorder %s153, 0
    %s156 = sadd.s32 %s155, 1
    %s157 = scalar_select %p154, %s155, %s156
    %p160 = pneg %p154
    %p161 = scmp.eq.s32.totalorder %s10, 1
    %p162 = por %p160, %p161
    %p163 = scmp.ne.s32.totalorder %s155, %s158
    %p164 = scmp.eq.s32.totalorder %s10, 0
    %p165 = por %p163, %p164
    %p166 = scmp.ne.s32.totalorder %s155, %s158
    %p167 = scmp.eq.s32.totalorder %s15, 1
    %p168 = por %p166, %p167
    %p169 = scmp.ne.s32.totalorder %s158, %s159
    %p170 = scmp.eq.s32.totalorder %s15, 0
    %p171 = por %p169, %p170
    %p172 = scmp.ne.s32.totalorder %s158, %s159
    %p173 = scmp.eq.s32.totalorder %s16, 1
    %p174 = por %p172, %p173
    %p176 = scmp.ne.s32.totalorder %s159, %s175
    %p177 = scmp.eq.s32.totalorder %s16, 0
    %p178 = por %p176, %p177
    %p179 = scmp.le.s32.totalorder 1, %s10
    %p180 = scmp.lt.s32.totalorder %s10, 3
    %p181 = pnand %p179, %p180
    %p182 = pneg %p181
    // Predicated region
    $region9: #{multi_head_attention.8} parent=5 // pred_check
      _
    $region10: #{multi_head_attention.8} parent=5 // pred_check_branch
      %184 = sbr.rel (%p181) target = $region12
    $region11: #{multi_head_attention.8} parent=5 // pred_region
      %s185 = ssub.s32 %s10, 1
    $region12: #{multi_head_attention.8} parent=5 // pred_fallthru
      _
    %p186 = scmp.lt.s32.totalorder %s10, 2
    // Predicated region
    $region13: #{multi_head_attention.8} parent=5 // pred_check
      %p187 = pneg %p186
    $region14: #{multi_head_attention.8} parent=5 // pred_check_branch
      %189 = sbr.rel (%p187) target = $region16
    $region15: #{multi_head_attention.8} parent=5 // pred_region
      // Predicated region
      $region17: #{multi_head_attention.8} parent=15 // pred_check
        %p190 = pneg %p51
      $region18: #{multi_head_attention.8} parent=15 // pred_check_branch
        %192 = sbr.rel (%p190) target = $region20
      $region19: #{multi_head_attention.8} parent=15 // pred_region
        %p193 = scmp.lt.s32.totalorder %s17, 1
        %s194 = scalar_select %p193, %s17, 1
        %p195 = scmp.lt.s32.totalorder %s18, 0
        %s196 = scalar_select %p195, %s18, 0
        %s197 = smul.addr %s194, 4
        %s198 = sadd.s32 %s196, %s197
        %s199 = smul.addr %s198, 4
        %s200 = scalar_lea.vmem %s0, %s199
      $region20: #{multi_head_attention.8} parent=15 // pred_fallthru
        _
      // Predicated region
      $region21: #{multi_head_attention.8} parent=15 // pred_check
        %p201 = pneg %p79
      $region22: #{multi_head_attention.8} parent=15 // pred_check_branch
        %203 = sbr.rel (%p201) target = $region24
      $region23: #{multi_head_attention.8} parent=15 // pred_region
        %p204 = scmp.lt.s32.totalorder %s17, 1
        %s205 = scalar_select %p204, %s17, 1
        %p206 = scmp.lt.s32.totalorder %s19, 0
        %s207 = scalar_select %p206, %s19, 0
        %s208 = smul.addr %s205, 4
        %s209 = sadd.s32 %s207, %s208
        %s210 = smul.addr %s209, 4
        %s211 = scalar_lea.vmem %s1, %s210
      $region24: #{multi_head_attention.8} parent=15 // pred_fallthru
        _
      // Predicated region
      $region25: #{multi_head_attention.8} parent=15 // pred_check
        %p212 = pneg %p107
      $region26: #{multi_head_attention.8} parent=15 // pred_check_branch
        %214 = sbr.rel (%p212) target = $region28
      $region27: #{multi_head_attention.8} parent=15 // pred_region
        %p215 = scmp.lt.s32.totalorder %s17, 1
        %s216 = scalar_select %p215, %s17, 1
        %p217 = scmp.lt.s32.totalorder %s19, 0
        %s218 = scalar_select %p217, %s19, 0
        %s219 = smul.addr %s216, 4
        %s220 = sadd.s32 %s218, %s219
        %s221 = smul.addr %s220, 4
        %s222 = scalar_lea.vmem %s2, %s221
      $region28: #{multi_head_attention.8} parent=15 // pred_fallthru
        _
      // Predicated region
      $region29: #{multi_head_attention.8} parent=15 // pred_check
        %p223 = pneg %p137
      $region30: #{multi_head_attention.8} parent=15 // pred_check_branch
        %225 = sbr.rel (%p223) target = $region32
      $region31: #{multi_head_attention.8} parent=15 // pred_region
        %p226 = scmp.lt.s32.totalorder %s17, 1
        %s227 = scalar_select %p226, %s17, 1
        %p228 = scmp.lt.s32.totalorder %s18, 0
        %s229 = scalar_select %p228, %s18, 0
        %p230 = scmp.lt.s32.totalorder %s19, 0
        %s231 = scalar_select %p230, %s19, 0
        %s232 = sadd.s32 %s231, %s229
        %s233 = sadd.s32 %s232, %s227
        %s234 = smul.addr %s233, 4
        %s235 = scalar_lea.vmem %s3, %s234
      $region32: #{multi_head_attention.8} parent=15 // pred_fallthru
        _
    $region16: #{multi_head_attention.8} parent=5 // pred_fallthru
      _
    %p236 = scmp.le.s32.totalorder 1, %s10
    %p237 = scmp.lt.s32.totalorder %s10, 3
    %p238 = pnand %p236, %p237
    %p239 = pneg %p238
    // Predicated region
    $region33: #{multi_head_attention.8} parent=5 // pred_check
      _
    $region34: #{multi_head_attention.8} parent=5 // pred_check_branch
      %241 = sbr.rel (%p238) target = $region36
    $region35: #{multi_head_attention.8} parent=5 // pred_region
      %s242 = ssub.s32 %s10, 1
      %p243 = scmp.lt.s32.totalorder %s20, 1
      %s244 = scalar_select %p243, %s20, 1
      %p245 = scmp.lt.s32.totalorder %s21, 0
      %s246 = scalar_select %p245, %s21, 0
      %s247 = smul.addr %s244, 4
      %s248 = sadd.s32 %s246, %s247
      %s249 = smul.addr %s248, 4
      %s250 = scalar_lea.vmem %s0, %s249
      %p251 = pneg %p57
      %p252 = pneg %p54
      %p253 = scmp.lt.s32.totalorder %s20, 1
      %s254 = scalar_select %p253, %s20, 1
      %p255 = scmp.lt.s32.totalorder %s22, 0
      %s256 = scalar_select %p255, %s22, 0
      %s257 = smul.addr %s254, 4
      %s258 = sadd.s32 %s256, %s257
      %s259 = smul.addr %s258, 4
      %s260 = scalar_lea.vmem %s1, %s259
      %p261 = pneg %p85
      %p262 = pneg %p82
      %p263 = scmp.lt.s32.totalorder %s20, 1
      %s264 = scalar_select %p263, %s20, 1
      %p265 = scmp.lt.s32.totalorder %s22, 0
      %s266 = scalar_select %p265, %s22, 0
      %s267 = smul.addr %s264, 4
      %s268 = sadd.s32 %s266, %s267
      %s269 = smul.addr %s268, 4
      %s270 = scalar_lea.vmem %s2, %s269
      %p271 = pneg %p113
      %p272 = pneg %p110
      %p273 = scmp.lt.s32.totalorder %s20, 1
      %s274 = scalar_select %p273, %s20, 1
      %p275 = scmp.lt.s32.totalorder %s21, 0
      %s276 = scalar_select %p275, %s21, 0
      %p277 = scmp.lt.s32.totalorder %s22, 0
      %s278 = scalar_select %p277, %s22, 0
      %s279 = sadd.s32 %s278, %s276
      %s280 = sadd.s32 %s279, %s274
      %s281 = smul.addr %s280, 4
      %s282 = scalar_lea.vmem %s3, %s281
      %p283 = pneg %p143
      %p284 = pneg %p140
      %p285 = pneg %p171
      %p286 = pneg %p168
      %p287 = scmp.lt.s32.totalorder %s20, 1
      %s288 = scalar_select %p287, %s20, 1
      %p289 = scmp.lt.s32.totalorder %s21, 0
      %s290 = scalar_select %p289, %s21, 0
      %s291 = smul.addr %s288, 4
      %s292 = sadd.s32 %s290, %s291
      %s293 = smul.addr %s292, 4
      %s294 = scalar_lea.vmem %s4, %s293
      %p295 = scmp.lt.s32.totalorder %s20, 1
      %s296 = scalar_select %p295, %s20, 1
      %p297 = scmp.lt.s32.totalorder %s21, 0
      %s298 = scalar_select %p297, %s21, 0
      %s299 = smul.addr %s296, 4
      %s300 = sadd.s32 %s298, %s299
      %s301 = smul.addr %s300, 4
      %s302 = scalar_lea.vmem %s0, %s301
      %p303 = scmp.lt.s32.totalorder %s20, 1
      %s304 = scalar_select %p303, %s20, 1
      %p305 = scmp.lt.s32.totalorder %s22, 0
      %s306 = scalar_select %p305, %s22, 0
      %s307 = smul.addr %s304, 4
      %s308 = sadd.s32 %s306, %s307
      %s309 = smul.addr %s308, 4
      %s310 = scalar_lea.vmem %s1, %s309
      %p311 = scmp.lt.s32.totalorder %s20, 1
      %s312 = scalar_select %p311, %s20, 1
      %p313 = scmp.lt.s32.totalorder %s22, 0
      %s314 = scalar_select %p313, %s22, 0
      %s315 = smul.addr %s312, 4
      %s316 = sadd.s32 %s314, %s315
      %s317 = smul.addr %s316, 4
      %s318 = scalar_lea.vmem %s2, %s317
      %p319 = scmp.lt.s32.totalorder %s20, 1
      %s320 = scalar_select %p319, %s20, 1
      %p321 = scmp.lt.s32.totalorder %s21, 0
      %s322 = scalar_select %p321, %s21, 0
      %p323 = scmp.lt.s32.totalorder %s22, 0
      %s324 = scalar_select %p323, %s22, 0
      %s325 = sadd.s32 %s324, %s322
      %s326 = sadd.s32 %s325, %s320
      %s327 = smul.addr %s326, 4
      %s328 = scalar_lea.vmem %s3, %s327
      %p329 = scmp.lt.s32.totalorder %s20, 1
      %s330 = scalar_select %p329, %s20, 1
      %p331 = scmp.lt.s32.totalorder %s21, 0
      %s332 = scalar_select %p331, %s21, 0
      %s333 = smul.addr %s330, 4
      %s334 = sadd.s32 %s332, %s333
      %s335 = smul.addr %s334, 4
      %s336 = scalar_lea.vmem %s4, %s335
      %p338 = scmp.eq.s32.totalorder %s22, 0
      // Predicated region
      $region37: #{multi_head_attention.8} parent=35 // pred_check
        %p339 = pneg %p338
      $region38: #{multi_head_attention.8} parent=35 // pred_check_branch
        %341 = sbr.rel (%p339) target = $region40
      $region39: #{multi_head_attention.8} parent=35 // pred_region
        %vm342 = vcmask 7168
        %343 = vst.msk [vmem:[#allocation2] sm:$0xff] %vm342, -inf
        %344 = vst.msk [vmem:[#allocation2 + $0x8] sm:$0xff] %vm342, -inf
        %345 = vst.msk [vmem:[#allocation2 + $0x10] sm:$0xff] %vm342, -inf
        %346 = vst.msk [vmem:[#allocation2 + $0x18] sm:$0xff] %vm342, -inf
        %347 = vst.msk [vmem:[#allocation3] sm:$0xff] %vm342, 0.0
        %348 = vst.msk [vmem:[#allocation3 + $0x8] sm:$0xff] %vm342, 0.0
        %349 = vst.msk [vmem:[#allocation3 + $0x10] sm:$0xff] %vm342, 0.0
        %350 = vst.msk [vmem:[#allocation3 + $0x18] sm:$0xff] %vm342, 0.0
        %vm351 = vcmask 64512
        %352 = vst.msk [vmem:[#allocation4] sm:$0xff] %vm351, 0.0
        %353 = vst.msk [vmem:[#allocation4 + $0x8] sm:$0xff] %vm351, 0.0
        %354 = vst.msk [vmem:[#allocation4 + $0x10] sm:$0xff] %vm351, 0.0
        %355 = vst.msk [vmem:[#allocation4 + $0x18] sm:$0xff] %vm351, 0.0
      $region40: #{multi_head_attention.8} parent=35 // pred_fallthru
        _
      %v356 = vld [vmem:[%s302] sm:$0xf]
      %v357 = vld [vmem:[%s302 + $0x4] sm:$0xf]
      %v358 = vld [vmem:[%s302 + $0x8] sm:$0xf]
      %v359 = vld [vmem:[%s302 + $0xc] sm:$0xf]
      %v360 = vld [vmem:[%s310] sm:$0xf]
      %v361 = vld [vmem:[%s310 + $0x4] sm:$0xf]
      %v362 = vld [vmem:[%s310 + $0x8] sm:$0xf]
      %v363 = vld [vmem:[%s310 + $0xc] sm:$0xf]
      %v364 = vld [vmem:[%s318] sm:$0xf]
      %v365 = vld [vmem:[%s318 + $0x4] sm:$0xf]
      %v366 = vld [vmem:[%s318 + $0x8] sm:$0xf]
      %v367 = vld [vmem:[%s318 + $0xc] sm:$0xf]
      %v368 = vld [vmem:[%s328] sm:$0xf]
      %v369 = vunpack.c.l.bf16 %v368
      %v370 = vmul.f32 %v369, -1e+09
      %vm371 = vcmask 64512
      %v373 = vsel %vm371, %v356, 0
      %v376 = vsel %vm371, %v360, 0
      %378 = vmatpush.bf16.xpose.msra.mxu0 0
      %379 = vmatpush.bf16.xpose.msra.mxu0 0
      %380 = vmatpush.bf16.xpose.msra.mxu0 0
      %381 = vmatpush.bf16.xpose.msra.mxu0 0
      %382 = vmatpush.bf16.xpose.msra.mxu0 0
      %383 = vmatpush.bf16.xpose.msra.mxu0 0
      %384 = vmatpush.bf16.xpose.msra.mxu0 0
      %385 = vmatpush.bf16.xpose.msra.mxu0 %v376
      %386 = vmatmul.bf16.gmra.mxu0 %v373
      %v387 = vpop.f32.mrf.mxu0
      %v388 = vadd.f32 %v370, %v387
      %v389 = vpop.f32.mrf.mxu0
      %390 = vdwg.mxu0
      %v392 = vsel %vm371, %v357, 0
      %v395 = vsel %vm371, %v361, 0
      %397 = vmatpush.bf16.xpose.msra.mxu0 0
      %398 = vmatpush.bf16.xpose.msra.mxu0 0
      %399 = vmatpush.bf16.xpose.msra.mxu0 0
      %400 = vmatpush.bf16.xpose.msra.mxu0 0
      %401 = vmatpush.bf16.xpose.msra.mxu0 0
      %402 = vmatpush.bf16.xpose.msra.mxu0 0
      %403 = vmatpush.bf16.xpose.msra.mxu0 0
      %404 = vmatpush.bf16.xpose.msra.mxu0 %v395
      %405 = vmatmul.bf16.gmra.mxu0 %v392
      %v406 = vpop.f32.mrf.mxu0
      %v407 = vadd.f32 %v370, %v406
      %v408 = vpop.f32.mrf.mxu0
      %409 = vdwg.mxu0
      %v411 = vsel %vm371, %v358, 0
      %v414 = vsel %vm371, %v362, 0
      %416 = vmatpush.bf16.xpose.msra.mxu0 0
      %417 = vmatpush.bf16.xpose.msra.mxu0 0
      %418 = vmatpush.bf16.xpose.msra.mxu0 0
      %419 = vmatpush.bf16.xpose.msra.mxu0 0
      %420 = vmatpush.bf16.xpose.msra.mxu0 0
      %421 = vmatpush.bf16.xpose.msra.mxu0 0
      %422 = vmatpush.bf16.xpose.msra.mxu0 0
      %423 = vmatpush.bf16.xpose.msra.mxu0 %v414
      %424 = vmatmul.bf16.gmra.mxu0 %v411
      %v425 = vpop.f32.mrf.mxu0
      %v426 = vadd.f32 %v370, %v425
      %v427 = vpop.f32.mrf.mxu0
      %428 = vdwg.mxu0
      %v430 = vsel %vm371, %v359, 0
      %v433 = vsel %vm371, %v363, 0
      %435 = vmatpush.bf16.xpose.msra.mxu0 0
      %436 = vmatpush.bf16.xpose.msra.mxu0 0
      %437 = vmatpush.bf16.xpose.msra.mxu0 0
      %438 = vmatpush.bf16.xpose.msra.mxu0 0
      %439 = vmatpush.bf16.xpose.msra.mxu0 0
      %440 = vmatpush.bf16.xpose.msra.mxu0 0
      %441 = vmatpush.bf16.xpose.msra.mxu0 0
      %442 = vmatpush.bf16.xpose.msra.mxu0 %v433
      %443 = vmatmul.bf16.gmra.mxu0 %v430
      %v444 = vpop.f32.mrf.mxu0
      %v445 = vadd.f32 %v370, %v444
      %v446 = vpop.f32.mrf.mxu0
      %447 = vdwg.mxu0
      %v448 = vld [vmem:[#allocation2] sm:$0xff]
      %v449 = vld [vmem:[#allocation2 + $0x8] sm:$0xff]
      %v450 = vld [vmem:[#allocation2 + $0x10] sm:$0xff]
      %v451 = vld [vmem:[#allocation2 + $0x18] sm:$0xff]
      %v452 = vsel %vm371, %v388, -inf
      %453 = vmax.xlane.f32.xlu0 %v452
      %v454 = vpop.xlane.xlu0 %453
      %v455 = vsel %vm371, %v407, -inf
      %456 = vmax.xlane.f32.xlu0 %v455
      %v457 = vpop.xlane.xlu0 %456
      %v458 = vsel %vm371, %v426, -inf
      %459 = vmax.xlane.f32.xlu0 %v458
      %v460 = vpop.xlane.xlu0 %459
      %v461 = vsel %vm371, %v445, -inf
      %462 = vmax.xlane.f32.xlu0 %v461
      %v463 = vpop.xlane.xlu0 %462
      %v464 = vmax.f32 %v448, %v454
      %v465 = vmax.f32 %v449, %v457
      %v466 = vmax.f32 %v450, %v460
      %v467 = vmax.f32 %v451, %v463
      %v468 = vsub.f32 %v448, %v464
      %v469 = vsub.f32 %v449, %v465
      %v470 = vsub.f32 %v450, %v466
      %v471 = vsub.f32 %v451, %v467
      %v472 = vmul.f32 %v468, 1.442695
      %v473 = vpow.pop %v472
      %v474 = vmul.f32 %v469, 1.442695
      %v475 = vpow.pop %v474
      %v476 = vmul.f32 %v470, 1.442695
      %v477 = vpow.pop %v476
      %v478 = vmul.f32 %v471, 1.442695
      %v479 = vpow.pop %v478
      %481 = vset.pattern.permute.xlu0 0
      %482 = vperm.xlu0 %481, %v464
      %v483 = vpop.permute.xlu0 %482
      %486 = vset.pattern.permute.xlu0 0
      %487 = vperm.xlu0 %486, %v465
      %v488 = vpop.permute.xlu0 %487
      %491 = vset.pattern.permute.xlu0 0
      %492 = vperm.xlu0 %491, %v466
      %v493 = vpop.permute.xlu0 %492
      %496 = vset.pattern.permute.xlu0 0
      %497 = vperm.xlu0 %496, %v467
      %v498 = vpop.permute.xlu0 %497
      %v500 = vsub.f32 %v388, %v483
      %v501 = vsub.f32 %v407, %v488
      %v502 = vsub.f32 %v426, %v493
      %v503 = vsub.f32 %v445, %v498
      %v504 = vmul.f32 %v500, 1.442695
      %v505 = vpow.pop %v504
      %v506 = vmul.f32 %v501, 1.442695
      %v507 = vpow.pop %v506
      %v508 = vmul.f32 %v502, 1.442695
      %v509 = vpow.pop %v508
      %v510 = vmul.f32 %v503, 1.442695
      %v511 = vpow.pop %v510
      %v512 = vld [vmem:[#allocation3] sm:$0xff]
      %v513 = vld [vmem:[#allocation3 + $0x8] sm:$0xff]
      %v514 = vld [vmem:[#allocation3 + $0x10] sm:$0xff]
      %v515 = vld [vmem:[#allocation3 + $0x18] sm:$0xff]
      %v516 = vmul.f32 %v473, %v512
      %v517 = vmul.f32 %v475, %v513
      %v518 = vmul.f32 %v477, %v514
      %v519 = vmul.f32 %v479, %v515
      %v520 = vsel %vm371, %v505, 0.0
      %521 = vadd.xlane.f32.xlu0 %v520
      %v522 = vpop.xlane.xlu0 %521
      %v523 = vsel %vm371, %v507, 0.0
      %524 = vadd.xlane.f32.xlu0 %v523
      %v525 = vpop.xlane.xlu0 %524
      %v526 = vsel %vm371, %v509, 0.0
      %527 = vadd.xlane.f32.xlu0 %v526
      %v528 = vpop.xlane.xlu0 %527
      %v529 = vsel %vm371, %v511, 0.0
      %530 = vadd.xlane.f32.xlu0 %v529
      %v531 = vpop.xlane.xlu0 %530
      %v532 = vadd.f32 %v516, %v522
      %v533 = vadd.f32 %v517, %v525
      %v534 = vadd.f32 %v518, %v528
      %v535 = vadd.f32 %v519, %v531
      %vm536 = vcmask 7168
      %537 = vst.msk [vmem:[#allocation3] sm:$0xff] %vm536, %v532
      %538 = vst.msk [vmem:[#allocation3 + $0x8] sm:$0xff] %vm536, %v533
      %539 = vst.msk [vmem:[#allocation3 + $0x10] sm:$0xff] %vm536, %v534
      %540 = vst.msk [vmem:[#allocation3 + $0x18] sm:$0xff] %vm536, %v535
      %v541 = vld [vmem:[#allocation4] sm:$0xff]
      %v542 = vld [vmem:[#allocation4 + $0x8] sm:$0xff]
      %v543 = vld [vmem:[#allocation4 + $0x10] sm:$0xff]
      %v544 = vld [vmem:[#allocation4 + $0x18] sm:$0xff]
      %546 = vset.pattern.permute.xlu0 0
      %547 = vperm.xlu0 %546, %v473
      %v548 = vpop.permute.xlu0 %547
      %551 = vset.pattern.permute.xlu0 0
      %552 = vperm.xlu0 %551, %v475
      %v553 = vpop.permute.xlu0 %552
      %556 = vset.pattern.permute.xlu0 0
      %557 = vperm.xlu0 %556, %v477
      %v558 = vpop.permute.xlu0 %557
      %561 = vset.pattern.permute.xlu0 0
      %562 = vperm.xlu0 %561, %v479
      %v563 = vpop.permute.xlu0 %562
      %v565 = vmul.f32 %v548, %v541
      %v566 = vmul.f32 %v553, %v542
      %v567 = vmul.f32 %v558, %v543
      %v568 = vmul.f32 %v563, %v544
      %v569 = vpack.c.bf16 %v505, %v505
      %v570 = vpack.c.bf16 %v507, %v507
      %v571 = vpack.c.bf16 %v509, %v509
      %v572 = vpack.c.bf16 %v511, %v511
      %v574 = vsel %vm371, %v569, 0
      %vm576 = vcmask 1043456
      %v578 = vsel %vm576, %v364, 0
      %580 = vmatpush.bf16.msra.mxu0 0
      %581 = vmatpush.bf16.msra.mxu0 0
      %582 = vmatpush.bf16.msra.mxu0 0
      %583 = vmatpush.bf16.msra.mxu0 0
      %584 = vmatpush.bf16.msra.mxu0 0
      %585 = vmatpush.bf16.msra.mxu0 0
      %586 = vmatpush.bf16.msra.mxu0 0
      %587 = vmatpush.bf16.msra.mxu0 %v578
      %588 = vmatmul.bf16.gmra.mxu0 %v574
      %v589 = vpop.f32.mrf.mxu0
      %v590 = vadd.f32 0.0, %v589
      %v591 = vpop.f32.mrf.mxu0
      %592 = vdwg.mxu0
      %v594 = vsel %vm371, %v570, 0
      %v597 = vsel %vm576, %v365, 0
      %599 = vmatpush.bf16.msra.mxu0 0
      %600 = vmatpush.bf16.msra.mxu0 0
      %601 = vmatpush.bf16.msra.mxu0 0
      %602 = vmatpush.bf16.msra.mxu0 0
      %603 = vmatpush.bf16.msra.mxu0 0
      %604 = vmatpush.bf16.msra.mxu0 0
      %605 = vmatpush.bf16.msra.mxu0 0
      %606 = vmatpush.bf16.msra.mxu0 %v597
      %607 = vmatmul.bf16.gmra.mxu0 %v594
      %v608 = vpop.f32.mrf.mxu0
      %v609 = vadd.f32 0.0, %v608
      %v610 = vpop.f32.mrf.mxu0
      %611 = vdwg.mxu0
      %v613 = vsel %vm371, %v571, 0
      %v616 = vsel %vm576, %v366, 0
      %618 = vmatpush.bf16.msra.mxu0 0
      %619 = vmatpush.bf16.msra.mxu0 0
      %620 = vmatpush.bf16.msra.mxu0 0
      %621 = vmatpush.bf16.msra.mxu0 0
      %622 = vmatpush.bf16.msra.mxu0 0
      %623 = vmatpush.bf16.msra.mxu0 0
      %624 = vmatpush.bf16.msra.mxu0 0
      %625 = vmatpush.bf16.msra.mxu0 %v616
      %626 = vmatmul.bf16.gmra.mxu0 %v613
      %v627 = vpop.f32.mrf.mxu0
      %v628 = vadd.f32 0.0, %v627
      %v629 = vpop.f32.mrf.mxu0
      %630 = vdwg.mxu0
      %v632 = vsel %vm371, %v572, 0
      %v635 = vsel %vm576, %v367, 0
      %637 = vmatpush.bf16.msra.mxu0 0
      %638 = vmatpush.bf16.msra.mxu0 0
      %639 = vmatpush.bf16.msra.mxu0 0
      %640 = vmatpush.bf16.msra.mxu0 0
      %641 = vmatpush.bf16.msra.mxu0 0
      %642 = vmatpush.bf16.msra.mxu0 0
      %643 = vmatpush.bf16.msra.mxu0 0
      %644 = vmatpush.bf16.msra.mxu0 %v635
      %645 = vmatmul.bf16.gmra.mxu0 %v632
      %v646 = vpop.f32.mrf.mxu0
      %v647 = vadd.f32 0.0, %v646
      %v648 = vpop.f32.mrf.mxu0
      %649 = vdwg.mxu0
      %v650 = vadd.f32 %v565, %v590
      %v651 = vadd.f32 %v566, %v609
      %v652 = vadd.f32 %v567, %v628
      %v653 = vadd.f32 %v568, %v647
      %654 = vst.msk [vmem:[#allocation4] sm:$0xff] %vm371, %v650
      %655 = vst.msk [vmem:[#allocation4 + $0x8] sm:$0xff] %vm371, %v651
      %656 = vst.msk [vmem:[#allocation4 + $0x10] sm:$0xff] %vm371, %v652
      %657 = vst.msk [vmem:[#allocation4 + $0x18] sm:$0xff] %vm371, %v653
      %658 = vst.msk [vmem:[#allocation2] sm:$0xff] %vm536, %v464
      %659 = vst.msk [vmem:[#allocation2 + $0x8] sm:$0xff] %vm536, %v465
      %660 = vst.msk [vmem:[#allocation2 + $0x10] sm:$0xff] %vm536, %v466
      %661 = vst.msk [vmem:[#allocation2 + $0x18] sm:$0xff] %vm536, %v467
      // Predicated region
      $region41: #{multi_head_attention.8} parent=35 // pred_check
        %p662 = pneg %p338
      $region42: #{multi_head_attention.8} parent=35 // pred_check_branch
        %664 = sbr.rel (%p662) target = $region44
      $region43: #{multi_head_attention.8} parent=35 // pred_region
        %v665 = vld [vmem:[#allocation4] sm:$0xff]
        %v666 = vld [vmem:[#allocation4 + $0x8] sm:$0xff]
        %v667 = vld [vmem:[#allocation4 + $0x10] sm:$0xff]
        %v668 = vld [vmem:[#allocation4 + $0x18] sm:$0xff]
        %v669 = vld [vmem:[#allocation3] sm:$0xff]
        %v670 = vld [vmem:[#allocation3 + $0x8] sm:$0xff]
        %v671 = vld [vmem:[#allocation3 + $0x10] sm:$0xff]
        %v672 = vld [vmem:[#allocation3 + $0x18] sm:$0xff]
        %v673 = vrcp.pop %v669
        %v674 = vrcp.pop %v670
        %v675 = vrcp.pop %v671
        %v676 = vrcp.pop %v672
        %678 = vset.pattern.permute.xlu0 0
        %679 = vperm.xlu0 %678, %v673
        %v680 = vpop.permute.xlu0 %679
        %683 = vset.pattern.permute.xlu0 0
        %684 = vperm.xlu0 %683, %v674
        %v685 = vpop.permute.xlu0 %684
        %688 = vset.pattern.permute.xlu0 0
        %689 = vperm.xlu0 %688, %v675
        %v690 = vpop.permute.xlu0 %689
        %693 = vset.pattern.permute.xlu0 0
        %694 = vperm.xlu0 %693, %v676
        %v695 = vpop.permute.xlu0 %694
        %v697 = vmul.f32 %v665, %v680
        %v698 = vmul.f32 %v666, %v685
        %v699 = vmul.f32 %v667, %v690
        %v700 = vmul.f32 %v668, %v695
        %v701 = vpack.c.bf16 %v697, %v697
        %v702 = vpack.c.bf16 %v698, %v698
        %v703 = vpack.c.bf16 %v699, %v699
        %v704 = vpack.c.bf16 %v700, %v700
        %vm705 = vcmask 60416
        %706 = vst.msk [vmem:[%s336] sm:$0xf] %vm705, %v701
        %707 = vst.msk [vmem:[%s336 + $0x4] sm:$0xf] %vm705, %v702
        %708 = vst.msk [vmem:[%s336 + $0x8] sm:$0xf] %vm705, %v703
        %709 = vst.msk [vmem:[%s336 + $0xc] sm:$0xf] %vm705, %v704
      $region44: #{multi_head_attention.8} parent=35 // pred_fallthru
        _
      %p710 = scmp.lt.s32.totalorder %s20, 1
      %s711 = scalar_select %p710, %s20, 1
      %p712 = scmp.lt.s32.totalorder %s21, 0
      %s713 = scalar_select %p712, %s21, 0
      %s714 = smul.addr %s711, 4
      %s715 = sadd.s32 %s713, %s714
      %s716 = smul.addr %s715, 4
      %s717 = scalar_lea.vmem %s4, %s716
      // Predicated region
      $region45: #{multi_head_attention.8} parent=35 // pred_check
        %p718 = pneg %p168
      $region46: #{multi_head_attention.8} parent=35 // pred_check_branch
        %720 = sbr.rel (%p718) target = $region48
      $region47: #{multi_head_attention.8} parent=35 // pred_region
        _
      $region48: #{multi_head_attention.8} parent=35 // pred_fallthru
        _
    $region36: #{multi_head_attention.8} parent=5 // pred_fallthru
      _
    %p721 = scmp.le.s32.totalorder 2, %s10
    // Predicated region
    $region49: #{multi_head_attention.8} parent=5 // pred_check
      %p722 = pneg %p721
    $region50: #{multi_head_attention.8} parent=5 // pred_check_branch
      %724 = sbr.rel (%p722) target = $region52
    $region51: #{multi_head_attention.8} parent=5 // pred_region
      %s725 = ssub.s32 %s10, 2
      // Predicated region
      $region53: #{multi_head_attention.8} parent=51 // pred_check
        %p726 = pneg %p174
      $region54: #{multi_head_attention.8} parent=51 // pred_check_branch
        %728 = sbr.rel (%p726) target = $region56
      $region55: #{multi_head_attention.8} parent=51 // pred_region
        %p729 = scmp.lt.s32.totalorder %s23, 1
        %s730 = scalar_select %p729, %s23, 1
        %p731 = scmp.lt.s32.totalorder %s24, 0
        %s732 = scalar_select %p731, %s24, 0
        %s733 = smul.addr %s730, 4
        %s734 = sadd.s32 %s732, %s733
        %s735 = smul.addr %s734, 4
        %s736 = scalar_lea.vmem %s4, %s735
      $region56: #{multi_head_attention.8} parent=51 // pred_fallthru
        _
    $region52: #{multi_head_attention.8} parent=5 // pred_fallthru
      _
  $region6: #{multi_head_attention.8} parent=0 // loop_footer
    %s14 = sadd.s32 1, %s10
  $region7: #{multi_head_attention.8} parent=0 // loop_footer_branch
    %9 = sbr.rel target = $region3
  $region8: #{multi_head_attention.8} parent=0 // loop_exit
    _

</llo_original>
